<compile_context>
chip_gen: v7x
topology: tpu7x:2x2x1
jax: 0.10.0
libtpu: 0.0.40
codegen_flags: <defaults>
</compile_context>

<pallas_src>
import jax
import jax.numpy as jnp
from jax.experimental import pallas as pl
from jax.experimental.pallas import tpu as pltpu

LANES = 128


def _sse_kernel(x_ref, w1_ref, b1_ref, w2_ref, b2_ref, o_ref):
    # x_ref:  (C, TR, 128)  VMEM input tile: dense spatial planes per channel
    # w1_ref: (C,)          SMEM squeeze conv weight
    # b1_ref: (1,)          SMEM squeeze conv bias
    # w2_ref: (OC*C,)       SMEM projection conv weight (row-major [oc, c])
    # b2_ref: (OC,)         SMEM projection conv bias
    # o_ref:  (OC, TR, 128) VMEM output tile (lane-dense stores)
    C = x_ref.shape[0]
    OC = o_ref.shape[0]

    # Spatial squeeze: per-voxel logit accumulated over channels with scalar
    # weights on dense (TR, 128) planes, then an EUP sigmoid.
    logit = x_ref[0].astype(jnp.float32) * w1_ref[0]
    for c in range(1, C):
        logit = logit + x_ref[c].astype(jnp.float32) * w1_ref[c]
    s = jax.nn.sigmoid(logit + b1_ref[0])                      # (TR, 128)

    # Channel excitation: out[oc] = s * (sum_c w2[oc,c] * x[c]) + b2[oc].
    # Unrolled over the tiny channel axes as fused scalar multiply-adds; the
    # gate and bias are fused into the single store per output channel.
    for oc in range(OC):
        z = x_ref[0].astype(jnp.float32) * w2_ref[oc * C + 0]
        for c in range(1, C):
            z = z + x_ref[c].astype(jnp.float32) * w2_ref[oc * C + c]
        o_ref[oc] = (s * z + b2_ref[oc]).astype(o_ref.dtype)


def _pick_tile_rows(R, C, OC, target_bytes, max_rows=2048):
    """Rows of 128 lanes per grid step so (C+OC)*TR*128*4 ~= target_bytes."""
    tr = int(target_bytes // ((C + OC) * LANES * 4))
    tr = max(8, tr)
    tr = min(tr, max_rows, R)
    if tr < R:
        tr = max(8, (tr // 8) * 8)      # blocks smaller than the array: multiple of 8
    return tr


def spatial_se_3d(x, w1, b1, w2, b2, *, target_tile_bytes=2 << 20):
    """
    x:  (B, C, D, H, W)
    w1: (C,)     squeeze conv weight   (Conv3d(C, 1, 1).weight squeezed)
    b1: (1,)     squeeze conv bias
    w2: (OC, C)  projection conv weight (Conv3d(C, OC, 1).weight squeezed)
    b2: (OC,)    projection conv bias
    returns (B, OC, D, H, W)
    """
    B, C, D, H, W = x.shape
    OC = w2.shape[0]
    S = D * H * W

    R = pl.cdiv(S, LANES)                       # spatial rows of 128 lanes
    TR = _pick_tile_rows(R, C, OC, target_tile_bytes)
    n_r = pl.cdiv(R, TR)

    # Guarantee >= 2 grid steps when possible so both v7x TensorCores get work.
    if B * n_r < 2 and R > 8:
        tr2 = ((pl.cdiv(R, 2) + 7) // 8) * 8
        if tr2 < R:
            TR = tr2
            n_r = pl.cdiv(R, TR)

    R_pad = n_r * TR
    S_pad = R_pad * LANES

    # Free view of the contiguous trailing dims; pad the spatial tail only when
    # S is not already a multiple of the tile (one extra copy in that case).
    x_flat = x.reshape(B, C, S)
    if S_pad != S:
        # TODO(synk): a pl.when-masked tail tile would avoid this padding copy.
        x_flat = jnp.pad(x_flat, ((0, 0), (0, 0), (0, S_pad - S)))
    x_planes = x_flat.reshape(B, C, R_pad, LANES)

    # SMEM scalar parameters (scalar operands broadcast for free on the VPU).
    w1_s = w1.reshape(C).astype(jnp.float32)
    b1_s = b1.reshape(1).astype(jnp.float32)
    w2_s = w2.reshape(OC * C).astype(jnp.float32)
    b2_s = b2.reshape(OC).astype(jnp.float32)

    # Tight VMEM budget: double-buffered in/out tiles + elementwise intermediates
    # (gate, logit, z) + 20% headroom, capped at 48 MiB (safe on v7x's 64 MiB).
    tile_bytes = (C + OC) * TR * LANES * 4
    interm_bytes = 3 * TR * LANES * 4
    vmem_limit = int(min(max(1.25 * (2 * tile_bytes + interm_bytes), 4 << 20),
                         48 << 20))

    out_planes = pl.pallas_call(
        _sse_kernel,
        out_shape=jax.ShapeDtypeStruct((B, OC, R_pad, LANES), x.dtype),
        grid_spec=pltpu.PrefetchScalarGridSpec(
            num_scalar_prefetch=0,
            grid=(B, n_r),
            in_specs=[
                pl.BlockSpec((None, C, TR, LANES), lambda b, r: (b, 0, r, 0)),
                pl.BlockSpec(memory_space=pltpu.MemorySpace.SMEM),   # w1
                pl.BlockSpec(memory_space=pltpu.MemorySpace.SMEM),   # b1
                pl.BlockSpec(memory_space=pltpu.MemorySpace.SMEM),   # w2
                pl.BlockSpec(memory_space=pltpu.MemorySpace.SMEM),   # b2
            ],
            out_specs=pl.BlockSpec((None, OC, TR, LANES), lambda b, r: (b, 0, r, 0)),
        ),
        compiler_params=pltpu.CompilerParams(
            dimension_semantics=("parallel", "parallel"),
            vmem_limit_bytes=vmem_limit),
    )(x_planes, w1_s, b1_s, w2_s, b2_s)

    out_flat = out_planes.reshape(B, OC, S_pad)
    if S_pad != S:
        out_flat = out_flat[:, :, :S]
    return out_flat.reshape(B, OC, D, H, W)


def _reference(x, w1, b1, w2, b2):
    # Pure-JAX reference with identical semantics in native NCDHW layout.
    hi = jax.lax.Precision.HIGHEST
    logit = jnp.einsum("bcdhw,c->bdhw", x, w1, precision=hi)[:, None] \
        + b1.reshape(1, 1, 1, 1, 1)
    s = jax.nn.sigmoid(logit)                                   # (B,1,D,H,W)
    y = x * s                                                   # (B,C,D,H,W)
    out = jnp.einsum("bcdhw,oc->bodhw", y, w2, precision=hi)
    return out + b2.reshape(1, -1, 1, 1, 1)


if __name__ == "__main__":
    key = jax.random.PRNGKey(0)
    B, C, D, H, W = 2, 4, 16, 16, 16        # S = 4096 -> R = 32 rows, grid (2, 1)
    OC = 8

    k_x, k_w1, k_b1, k_w2, k_b2 = jax.random.split(key, 5)
    x = jax.random.normal(k_x, (B, C, D, H, W), dtype=jnp.float32)

    # Parameter shapes match squeezed Conv3d(C,1,1) and Conv3d(C,OC,1) weights.
    w1 = jax.random.normal(k_w1, (C,), dtype=jnp.float32) * 0.1
    b1 = jax.random.normal(k_b1, (1,), dtype=jnp.float32) * 0.1
    w2 = jax.random.normal(k_w2, (OC, C), dtype=jnp.float32) * 0.1
    b2 = jax.random.normal(k_b2, (OC,), dtype=jnp.float32) * 0.1

    out = spatial_se_3d(x, w1, b1, w2, b2)
    out = jax.block_until_ready(out)

    ref = _reference(x, w1, b1, w2, b2)
    assert out.shape == (B, OC, D, H, W), out.shape
    assert jnp.allclose(out, ref, atol=1e-5, rtol=1e-4), \
        float(jnp.max(jnp.abs(out - ref)))

    print("KERNEL_OK")
</pallas_src>

<mosaic_0001>
module attributes {stable_mosaic.version = 11 : i64} {
  func.func @_sse_kernel(%arg0: i32, %arg1: i32, %arg2: memref<1x4x32x128xf32, #tpu.memory_space<vmem>>, %arg3: memref<4xf32, #tpu.memory_space<smem>>, %arg4: memref<1xf32, #tpu.memory_space<smem>>, %arg5: memref<32xf32, #tpu.memory_space<smem>>, %arg6: memref<8xf32, #tpu.memory_space<smem>>, %arg7: memref<1x8x32x128xf32, #tpu.memory_space<vmem>>) attributes {dimension_semantics = [#tpu.dimension_semantics<parallel>, #tpu.dimension_semantics<parallel>], iteration_bounds = array<i64: 2, 1>, scalar_prefetch = 0 : i64, scratch_operands = 0 : i64, tpu.core_type = #tpu.core_type<tc>, window_params = [{transform_indices = @transform_0, window_bounds = array<i64: 1, 4, 32, 128>}, {transform_indices = @transform_1, window_bounds = array<i64: 4>}, {transform_indices = @transform_2, window_bounds = array<i64: 1>}, {transform_indices = @transform_3, window_bounds = array<i64: 32>}, {transform_indices = @transform_4, window_bounds = array<i64: 8>}, {transform_indices = @transform_5, window_bounds = array<i64: 1, 8, 32, 128>}]} {
    %c0 = arith.constant 0 : index
    %c0_0 = arith.constant 0 : index
    %c0_1 = arith.constant 0 : index
    %c0_2 = arith.constant 0 : index
    %0 = vector.load %arg2[%c0, %c0_0, %c0_1, %c0_2] : memref<1x4x32x128xf32, #tpu.memory_space<vmem>>, vector<1x1x32x128xf32>
    %1 = vector.shape_cast %0 : vector<1x1x32x128xf32> to vector<32x128xf32>
    %c0_3 = arith.constant 0 : index
    %2 = memref.load %arg3[%c0_3] : memref<4xf32, #tpu.memory_space<smem>>
    %3 = vector.broadcast %2 : f32 to vector<32x128xf32>
    %4 = arith.mulf %1, %3 : vector<32x128xf32>
    %c0_4 = arith.constant 0 : index
    %c1 = arith.constant 1 : index
    %c0_5 = arith.constant 0 : index
    %c0_6 = arith.constant 0 : index
    %5 = vector.load %arg2[%c0_4, %c1, %c0_5, %c0_6] : memref<1x4x32x128xf32, #tpu.memory_space<vmem>>, vector<1x1x32x128xf32>
    %6 = vector.shape_cast %5 : vector<1x1x32x128xf32> to vector<32x128xf32>
    %c1_7 = arith.constant 1 : index
    %7 = memref.load %arg3[%c1_7] : memref<4xf32, #tpu.memory_space<smem>>
    %8 = vector.broadcast %7 : f32 to vector<32x128xf32>
    %9 = arith.mulf %6, %8 : vector<32x128xf32>
    %10 = arith.addf %4, %9 : vector<32x128xf32>
    %c0_8 = arith.constant 0 : index
    %c2 = arith.constant 2 : index
    %c0_9 = arith.constant 0 : index
    %c0_10 = arith.constant 0 : index
    %11 = vector.load %arg2[%c0_8, %c2, %c0_9, %c0_10] : memref<1x4x32x128xf32, #tpu.memory_space<vmem>>, vector<1x1x32x128xf32>
    %12 = vector.shape_cast %11 : vector<1x1x32x128xf32> to vector<32x128xf32>
    %c2_11 = arith.constant 2 : index
    %13 = memref.load %arg3[%c2_11] : memref<4xf32, #tpu.memory_space<smem>>
    %14 = vector.broadcast %13 : f32 to vector<32x128xf32>
    %15 = arith.mulf %12, %14 : vector<32x128xf32>
    %16 = arith.addf %10, %15 : vector<32x128xf32>
    %c0_12 = arith.constant 0 : index
    %c3 = arith.constant 3 : index
    %c0_13 = arith.constant 0 : index
    %c0_14 = arith.constant 0 : index
    %17 = vector.load %arg2[%c0_12, %c3, %c0_13, %c0_14] : memref<1x4x32x128xf32, #tpu.memory_space<vmem>>, vector<1x1x32x128xf32>
    %18 = vector.shape_cast %17 : vector<1x1x32x128xf32> to vector<32x128xf32>
    %c3_15 = arith.constant 3 : index
    %19 = memref.load %arg3[%c3_15] : memref<4xf32, #tpu.memory_space<smem>>
    %20 = vector.broadcast %19 : f32 to vector<32x128xf32>
    %21 = arith.mulf %18, %20 : vector<32x128xf32>
    %22 = arith.addf %16, %21 : vector<32x128xf32>
    %c0_16 = arith.constant 0 : index
    %23 = memref.load %arg4[%c0_16] : memref<1xf32, #tpu.memory_space<smem>>
    %24 = vector.broadcast %23 : f32 to vector<32x128xf32>
    %25 = arith.addf %22, %24 : vector<32x128xf32>
    %26 = arith.negf %25 : vector<32x128xf32>
    %27 = math.exp %26 : vector<32x128xf32>
    %cst = arith.constant 1.000000e+00 : f32
    %28 = vector.broadcast %cst : f32 to vector<32x128xf32>
    %29 = arith.addf %28, %27 : vector<32x128xf32>
    %30 = arith.divf %28, %29 : vector<32x128xf32>
    %c0_17 = arith.constant 0 : index
    %c0_18 = arith.constant 0 : index
    %c0_19 = arith.constant 0 : index
    %c0_20 = arith.constant 0 : index
    %31 = vector.load %arg2[%c0_17, %c0_18, %c0_19, %c0_20] : memref<1x4x32x128xf32, #tpu.memory_space<vmem>>, vector<1x1x32x128xf32>
    %32 = vector.shape_cast %31 : vector<1x1x32x128xf32> to vector<32x128xf32>
    %c0_21 = arith.constant 0 : index
    %33 = memref.load %arg5[%c0_21] : memref<32xf32, #tpu.memory_space<smem>>
    %34 = vector.broadcast %33 : f32 to vector<32x128xf32>
    %35 = arith.mulf %32, %34 : vector<32x128xf32>
    %c0_22 = arith.constant 0 : index
    %c1_23 = arith.constant 1 : index
    %c0_24 = arith.constant 0 : index
    %c0_25 = arith.constant 0 : index
    %36 = vector.load %arg2[%c0_22, %c1_23, %c0_24, %c0_25] : memref<1x4x32x128xf32, #tpu.memory_space<vmem>>, vector<1x1x32x128xf32>
    %37 = vector.shape_cast %36 : vector<1x1x32x128xf32> to vector<32x128xf32>
    %c1_26 = arith.constant 1 : index
    %38 = memref.load %arg5[%c1_26] : memref<32xf32, #tpu.memory_space<smem>>
    %39 = vector.broadcast %38 : f32 to vector<32x128xf32>
    %40 = arith.mulf %37, %39 : vector<32x128xf32>
    %41 = arith.addf %35, %40 : vector<32x128xf32>
    %c0_27 = arith.constant 0 : index
    %c2_28 = arith.constant 2 : index
    %c0_29 = arith.constant 0 : index
    %c0_30 = arith.constant 0 : index
    %42 = vector.load %arg2[%c0_27, %c2_28, %c0_29, %c0_30] : memref<1x4x32x128xf32, #tpu.memory_space<vmem>>, vector<1x1x32x128xf32>
    %43 = vector.shape_cast %42 : vector<1x1x32x128xf32> to vector<32x128xf32>
    %c2_31 = arith.constant 2 : index
    %44 = memref.load %arg5[%c2_31] : memref<32xf32, #tpu.memory_space<smem>>
    %45 = vector.broadcast %44 : f32 to vector<32x128xf32>
    %46 = arith.mulf %43, %45 : vector<32x128xf32>
    %47 = arith.addf %41, %46 : vector<32x128xf32>
    %c0_32 = arith.constant 0 : index
    %c3_33 = arith.constant 3 : index
    %c0_34 = arith.constant 0 : index
    %c0_35 = arith.constant 0 : index
    %48 = vector.load %arg2[%c0_32, %c3_33, %c0_34, %c0_35] : memref<1x4x32x128xf32, #tpu.memory_space<vmem>>, vector<1x1x32x128xf32>
    %49 = vector.shape_cast %48 : vector<1x1x32x128xf32> to vector<32x128xf32>
    %c3_36 = arith.constant 3 : index
    %50 = memref.load %arg5[%c3_36] : memref<32xf32, #tpu.memory_space<smem>>
    %51 = vector.broadcast %50 : f32 to vector<32x128xf32>
    %52 = arith.mulf %49, %51 : vector<32x128xf32>
    %53 = arith.addf %47, %52 : vector<32x128xf32>
    %54 = arith.mulf %30, %53 : vector<32x128xf32>
    %c0_37 = arith.constant 0 : index
    %55 = memref.load %arg6[%c0_37] : memref<8xf32, #tpu.memory_space<smem>>
    %56 = vector.broadcast %55 : f32 to vector<32x128xf32>
    %57 = arith.addf %54, %56 : vector<32x128xf32>
    %c0_38 = arith.constant 0 : index
    %c0_39 = arith.constant 0 : index
    %c0_40 = arith.constant 0 : index
    %c0_41 = arith.constant 0 : index
    %58 = vector.load %arg7[%c0_38, %c0_39, %c0_40, %c0_41] : memref<1x8x32x128xf32, #tpu.memory_space<vmem>>, vector<1x1x32x128xf32>
    %59 = vector.shape_cast %58 : vector<1x1x32x128xf32> to vector<32x128xf32>
    %60 = vector.shape_cast %57 : vector<32x128xf32> to vector<1x1x32x128xf32>
    tpu.vector_store %arg7[%c0_38, %c0_39, %c0_40, %c0_41], %60 {strides = array<i32>} : memref<1x8x32x128xf32, #tpu.memory_space<vmem>>, vector<1x1x32x128xf32>,
    %c0_42 = arith.constant 0 : index
    %c0_43 = arith.constant 0 : index
    %c0_44 = arith.constant 0 : index
    %c0_45 = arith.constant 0 : index
    %61 = vector.load %arg2[%c0_42, %c0_43, %c0_44, %c0_45] : memref<1x4x32x128xf32, #tpu.memory_space<vmem>>, vector<1x1x32x128xf32>
    %62 = vector.shape_cast %61 : vector<1x1x32x128xf32> to vector<32x128xf32>
    %c4 = arith.constant 4 : index
    %63 = memref.load %arg5[%c4] : memref<32xf32, #tpu.memory_space<smem>>
    %64 = vector.broadcast %63 : f32 to vector<32x128xf32>
    %65 = arith.mulf %62, %64 : vector<32x128xf32>
    %c0_46 = arith.constant 0 : index
    %c1_47 = arith.constant 1 : index
    %c0_48 = arith.constant 0 : index
    %c0_49 = arith.constant 0 : index
    %66 = vector.load %arg2[%c0_46, %c1_47, %c0_48, %c0_49] : memref<1x4x32x128xf32, #tpu.memory_space<vmem>>, vector<1x1x32x128xf32>
    %67 = vector.shape_cast %66 : vector<1x1x32x128xf32> to vector<32x128xf32>
    %c5 = arith.constant 5 : index
    %68 = memref.load %arg5[%c5] : memref<32xf32, #tpu.memory_space<smem>>
    %69 = vector.broadcast %68 : f32 to vector<32x128xf32>
    %70 = arith.mulf %67, %69 : vector<32x128xf32>
    %71 = arith.addf %65, %70 : vector<32x128xf32>
    %c0_50 = arith.constant 0 : index
    %c2_51 = arith.constant 2 : index
    %c0_52 = arith.constant 0 : index
    %c0_53 = arith.constant 0 : index
    %72 = vector.load %arg2[%c0_50, %c2_51, %c0_52, %c0_53] : memref<1x4x32x128xf32, #tpu.memory_space<vmem>>, vector<1x1x32x128xf32>
    %73 = vector.shape_cast %72 : vector<1x1x32x128xf32> to vector<32x128xf32>
    %c6 = arith.constant 6 : index
    %74 = memref.load %arg5[%c6] : memref<32xf32, #tpu.memory_space<smem>>
    %75 = vector.broadcast %74 : f32 to vector<32x128xf32>
    %76 = arith.mulf %73, %75 : vector<32x128xf32>
    %77 = arith.addf %71, %76 : vector<32x128xf32>
    %c0_54 = arith.constant 0 : index
    %c3_55 = arith.constant 3 : index
    %c0_56 = arith.constant 0 : index
    %c0_57 = arith.constant 0 : index
    %78 = vector.load %arg2[%c0_54, %c3_55, %c0_56, %c0_57] : memref<1x4x32x128xf32, #tpu.memory_space<vmem>>, vector<1x1x32x128xf32>
    %79 = vector.shape_cast %78 : vector<1x1x32x128xf32> to vector<32x128xf32>
    %c7 = arith.constant 7 : index
    %80 = memref.load %arg5[%c7] : memref<32xf32, #tpu.memory_space<smem>>
    %81 = vector.broadcast %80 : f32 to vector<32x128xf32>
    %82 = arith.mulf %79, %81 : vector<32x128xf32>
    %83 = arith.addf %77, %82 : vector<32x128xf32>
    %84 = arith.mulf %30, %83 : vector<32x128xf32>
    %c1_58 = arith.constant 1 : index
    %85 = memref.load %arg6[%c1_58] : memref<8xf32, #tpu.memory_space<smem>>
    %86 = vector.broadcast %85 : f32 to vector<32x128xf32>
    %87 = arith.addf %84, %86 : vector<32x128xf32>
    %c0_59 = arith.constant 0 : index
    %c1_60 = arith.constant 1 : index
    %c0_61 = arith.constant 0 : index
    %c0_62 = arith.constant 0 : index
    %88 = vector.load %arg7[%c0_59, %c1_60, %c0_61, %c0_62] : memref<1x8x32x128xf32, #tpu.memory_space<vmem>>, vector<1x1x32x128xf32>
    %89 = vector.shape_cast %88 : vector<1x1x32x128xf32> to vector<32x128xf32>
    %90 = vector.shape_cast %87 : vector<32x128xf32> to vector<1x1x32x128xf32>
    tpu.vector_store %arg7[%c0_59, %c1_60, %c0_61, %c0_62], %90 {strides = array<i32>} : memref<1x8x32x128xf32, #tpu.memory_space<vmem>>, vector<1x1x32x128xf32>,
    %c0_63 = arith.constant 0 : index
    %c0_64 = arith.constant 0 : index
    %c0_65 = arith.constant 0 : index
    %c0_66 = arith.constant 0 : index
    %91 = vector.load %arg2[%c0_63, %c0_64, %c0_65, %c0_66] : memref<1x4x32x128xf32, #tpu.memory_space<vmem>>, vector<1x1x32x128xf32>
    %92 = vector.shape_cast %91 : vector<1x1x32x128xf32> to vector<32x128xf32>
    %c8 = arith.constant 8 : index
    %93 = memref.load %arg5[%c8] : memref<32xf32, #tpu.memory_space<smem>>
    %94 = vector.broadcast %93 : f32 to vector<32x128xf32>
    %95 = arith.mulf %92, %94 : vector<32x128xf32>
    %c0_67 = arith.constant 0 : index
    %c1_68 = arith.constant 1 : index
    %c0_69 = arith.constant 0 : index
    %c0_70 = arith.constant 0 : index
    %96 = vector.load %arg2[%c0_67, %c1_68, %c0_69, %c0_70] : memref<1x4x32x128xf32, #tpu.memory_space<vmem>>, vector<1x1x32x128xf32>
    %97 = vector.shape_cast %96 : vector<1x1x32x128xf32> to vector<32x128xf32>
    %c9 = arith.constant 9 : index
    %98 = memref.load %arg5[%c9] : memref<32xf32, #tpu.memory_space<smem>>
    %99 = vector.broadcast %98 : f32 to vector<32x128xf32>
    %100 = arith.mulf %97, %99 : vector<32x128xf32>
    %101 = arith.addf %95, %100 : vector<32x128xf32>
    %c0_71 = arith.constant 0 : index
    %c2_72 = arith.constant 2 : index
    %c0_73 = arith.constant 0 : index
    %c0_74 = arith.constant 0 : index
    %102 = vector.load %arg2[%c0_71, %c2_72, %c0_73, %c0_74] : memref<1x4x32x128xf32, #tpu.memory_space<vmem>>, vector<1x1x32x128xf32>
    %103 = vector.shape_cast %102 : vector<1x1x32x128xf32> to vector<32x128xf32>
    %c10 = arith.constant 10 : index
    %104 = memref.load %arg5[%c10] : memref<32xf32, #tpu.memory_space<smem>>
    %105 = vector.broadcast %104 : f32 to vector<32x128xf32>
    %106 = arith.mulf %103, %105 : vector<32x128xf32>
    %107 = arith.addf %101, %106 : vector<32x128xf32>
    %c0_75 = arith.constant 0 : index
    %c3_76 = arith.constant 3 : index
    %c0_77 = arith.constant 0 : index
    %c0_78 = arith.constant 0 : index
    %108 = vector.load %arg2[%c0_75, %c3_76, %c0_77, %c0_78] : memref<1x4x32x128xf32, #tpu.memory_space<vmem>>, vector<1x1x32x128xf32>
    %109 = vector.shape_cast %108 : vector<1x1x32x128xf32> to vector<32x128xf32>
    %c11 = arith.constant 11 : index
    %110 = memref.load %arg5[%c11] : memref<32xf32, #tpu.memory_space<smem>>
    %111 = vector.broadcast %110 : f32 to vector<32x128xf32>
    %112 = arith.mulf %109, %111 : vector<32x128xf32>
    %113 = arith.addf %107, %112 : vector<32x128xf32>
    %114 = arith.mulf %30, %113 : vector<32x128xf32>
    %c2_79 = arith.constant 2 : index
    %115 = memref.load %arg6[%c2_79] : memref<8xf32, #tpu.memory_space<smem>>
    %116 = vector.broadcast %115 : f32 to vector<32x128xf32>
    %117 = arith.addf %114, %116 : vector<32x128xf32>
    %c0_80 = arith.constant 0 : index
    %c2_81 = arith.constant 2 : index
    %c0_82 = arith.constant 0 : index
    %c0_83 = arith.constant 0 : index
    %118 = vector.load %arg7[%c0_80, %c2_81, %c0_82, %c0_83] : memref<1x8x32x128xf32, #tpu.memory_space<vmem>>, vector<1x1x32x128xf32>
    %119 = vector.shape_cast %118 : vector<1x1x32x128xf32> to vector<32x128xf32>
    %120 = vector.shape_cast %117 : vector<32x128xf32> to vector<1x1x32x128xf32>
    tpu.vector_store %arg7[%c0_80, %c2_81, %c0_82, %c0_83], %120 {strides = array<i32>} : memref<1x8x32x128xf32, #tpu.memory_space<vmem>>, vector<1x1x32x128xf32>,
    %c0_84 = arith.constant 0 : index
    %c0_85 = arith.constant 0 : index
    %c0_86 = arith.constant 0 : index
    %c0_87 = arith.constant 0 : index
    %121 = vector.load %arg2[%c0_84, %c0_85, %c0_86, %c0_87] : memref<1x4x32x128xf32, #tpu.memory_space<vmem>>, vector<1x1x32x128xf32>
    %122 = vector.shape_cast %121 : vector<1x1x32x128xf32> to vector<32x128xf32>
    %c12 = arith.constant 12 : index
    %123 = memref.load %arg5[%c12] : memref<32xf32, #tpu.memory_space<smem>>
    %124 = vector.broadcast %123 : f32 to vector<32x128xf32>
    %125 = arith.mulf %122, %124 : vector<32x128xf32>
    %c0_88 = arith.constant 0 : index
    %c1_89 = arith.constant 1 : index
    %c0_90 = arith.constant 0 : index
    %c0_91 = arith.constant 0 : index
    %126 = vector.load %arg2[%c0_88, %c1_89, %c0_90, %c0_91] : memref<1x4x32x128xf32, #tpu.memory_space<vmem>>, vector<1x1x32x128xf32>
    %127 = vector.shape_cast %126 : vector<1x1x32x128xf32> to vector<32x128xf32>
    %c13 = arith.constant 13 : index
    %128 = memref.load %arg5[%c13] : memref<32xf32, #tpu.memory_space<smem>>
    %129 = vector.broadcast %128 : f32 to vector<32x128xf32>
    %130 = arith.mulf %127, %129 : vector<32x128xf32>
    %131 = arith.addf %125, %130 : vector<32x128xf32>
    %c0_92 = arith.constant 0 : index
    %c2_93 = arith.constant 2 : index
    %c0_94 = arith.constant 0 : index
    %c0_95 = arith.constant 0 : index
    %132 = vector.load %arg2[%c0_92, %c2_93, %c0_94, %c0_95] : memref<1x4x32x128xf32, #tpu.memory_space<vmem>>, vector<1x1x32x128xf32>
    %133 = vector.shape_cast %132 : vector<1x1x32x128xf32> to vector<32x128xf32>
    %c14 = arith.constant 14 : index
    %134 = memref.load %arg5[%c14] : memref<32xf32, #tpu.memory_space<smem>>
    %135 = vector.broadcast %134 : f32 to vector<32x128xf32>
    %136 = arith.mulf %133, %135 : vector<32x128xf32>
    %137 = arith.addf %131, %136 : vector<32x128xf32>
    %c0_96 = arith.constant 0 : index
    %c3_97 = arith.constant 3 : index
    %c0_98 = arith.constant 0 : index
    %c0_99 = arith.constant 0 : index
    %138 = vector.load %arg2[%c0_96, %c3_97, %c0_98, %c0_99] : memref<1x4x32x128xf32, #tpu.memory_space<vmem>>, vector<1x1x32x128xf32>
    %139 = vector.shape_cast %138 : vector<1x1x32x128xf32> to vector<32x128xf32>
    %c15 = arith.constant 15 : index
    %140 = memref.load %arg5[%c15] : memref<32xf32, #tpu.memory_space<smem>>
    %141 = vector.broadcast %140 : f32 to vector<32x128xf32>
    %142 = arith.mulf %139, %141 : vector<32x128xf32>
    %143 = arith.addf %137, %142 : vector<32x128xf32>
    %144 = arith.mulf %30, %143 : vector<32x128xf32>
    %c3_100 = arith.constant 3 : index
    %145 = memref.load %arg6[%c3_100] : memref<8xf32, #tpu.memory_space<smem>>
    %146 = vector.broadcast %145 : f32 to vector<32x128xf32>
    %147 = arith.addf %144, %146 : vector<32x128xf32>
    %c0_101 = arith.constant 0 : index
    %c3_102 = arith.constant 3 : index
    %c0_103 = arith.constant 0 : index
    %c0_104 = arith.constant 0 : index
    %148 = vector.load %arg7[%c0_101, %c3_102, %c0_103, %c0_104] : memref<1x8x32x128xf32, #tpu.memory_space<vmem>>, vector<1x1x32x128xf32>
    %149 = vector.shape_cast %148 : vector<1x1x32x128xf32> to vector<32x128xf32>
    %150 = vector.shape_cast %147 : vector<32x128xf32> to vector<1x1x32x128xf32>
    tpu.vector_store %arg7[%c0_101, %c3_102, %c0_103, %c0_104], %150 {strides = array<i32>} : memref<1x8x32x128xf32, #tpu.memory_space<vmem>>, vector<1x1x32x128xf32>,
    %c0_105 = arith.constant 0 : index
    %c0_106 = arith.constant 0 : index
    %c0_107 = arith.constant 0 : index
    %c0_108 = arith.constant 0 : index
    %151 = vector.load %arg2[%c0_105, %c0_106, %c0_107, %c0_108] : memref<1x4x32x128xf32, #tpu.memory_space<vmem>>, vector<1x1x32x128xf32>
    %152 = vector.shape_cast %151 : vector<1x1x32x128xf32> to vector<32x128xf32>
    %c16 = arith.constant 16 : index
    %153 = memref.load %arg5[%c16] : memref<32xf32, #tpu.memory_space<smem>>
    %154 = vector.broadcast %153 : f32 to vector<32x128xf32>
    %155 = arith.mulf %152, %154 : vector<32x128xf32>
    %c0_109 = arith.constant 0 : index
    %c1_110 = arith.constant 1 : index
    %c0_111 = arith.constant 0 : index
    %c0_112 = arith.constant 0 : index
    %156 = vector.load %arg2[%c0_109, %c1_110, %c0_111, %c0_112] : memref<1x4x32x128xf32, #tpu.memory_space<vmem>>, vector<1x1x32x128xf32>
    %157 = vector.shape_cast %156 : vector<1x1x32x128xf32> to vector<32x128xf32>
    %c17 = arith.constant 17 : index
    %158 = memref.load %arg5[%c17] : memref<32xf32, #tpu.memory_space<smem>>
    %159 = vector.broadcast %158 : f32 to vector<32x128xf32>
    %160 = arith.mulf %157, %159 : vector<32x128xf32>
    %161 = arith.addf %155, %160 : vector<32x128xf32>
    %c0_113 = arith.constant 0 : index
    %c2_114 = arith.constant 2 : index
    %c0_115 = arith.constant 0 : index
    %c0_116 = arith.constant 0 : index
    %162 = vector.load %arg2[%c0_113, %c2_114, %c0_115, %c0_116] : memref<1x4x32x128xf32, #tpu.memory_space<vmem>>, vector<1x1x32x128xf32>
    %163 = vector.shape_cast %162 : vector<1x1x32x128xf32> to vector<32x128xf32>
    %c18 = arith.constant 18 : index
    %164 = memref.load %arg5[%c18] : memref<32xf32, #tpu.memory_space<smem>>
    %165 = vector.broadcast %164 : f32 to vector<32x128xf32>
    %166 = arith.mulf %163, %165 : vector<32x128xf32>
    %167 = arith.addf %161, %166 : vector<32x128xf32>
    %c0_117 = arith.constant 0 : index
    %c3_118 = arith.constant 3 : index
    %c0_119 = arith.constant 0 : index
    %c0_120 = arith.constant 0 : index
    %168 = vector.load %arg2[%c0_117, %c3_118, %c0_119, %c0_120] : memref<1x4x32x128xf32, #tpu.memory_space<vmem>>, vector<1x1x32x128xf32>
    %169 = vector.shape_cast %168 : vector<1x1x32x128xf32> to vector<32x128xf32>
    %c19 = arith.constant 19 : index
    %170 = memref.load %arg5[%c19] : memref<32xf32, #tpu.memory_space<smem>>
    %171 = vector.broadcast %170 : f32 to vector<32x128xf32>
    %172 = arith.mulf %169, %171 : vector<32x128xf32>
    %173 = arith.addf %167, %172 : vector<32x128xf32>
    %174 = arith.mulf %30, %173 : vector<32x128xf32>
    %c4_121 = arith.constant 4 : index
    %175 = memref.load %arg6[%c4_121] : memref<8xf32, #tpu.memory_space<smem>>
    %176 = vector.broadcast %175 : f32 to vector<32x128xf32>
    %177 = arith.addf %174, %176 : vector<32x128xf32>
    %c0_122 = arith.constant 0 : index
    %c4_123 = arith.constant 4 : index
    %c0_124 = arith.constant 0 : index
    %c0_125 = arith.constant 0 : index
    %178 = vector.load %arg7[%c0_122, %c4_123, %c0_124, %c0_125] : memref<1x8x32x128xf32, #tpu.memory_space<vmem>>, vector<1x1x32x128xf32>
    %179 = vector.shape_cast %178 : vector<1x1x32x128xf32> to vector<32x128xf32>
    %180 = vector.shape_cast %177 : vector<32x128xf32> to vector<1x1x32x128xf32>
    tpu.vector_store %arg7[%c0_122, %c4_123, %c0_124, %c0_125], %180 {strides = array<i32>} : memref<1x8x32x128xf32, #tpu.memory_space<vmem>>, vector<1x1x32x128xf32>,
    %c0_126 = arith.constant 0 : index
    %c0_127 = arith.constant 0 : index
    %c0_128 = arith.constant 0 : index
    %c0_129 = arith.constant 0 : index
    %181 = vector.load %arg2[%c0_126, %c0_127, %c0_128, %c0_129] : memref<1x4x32x128xf32, #tpu.memory_space<vmem>>, vector<1x1x32x128xf32>
    %182 = vector.shape_cast %181 : vector<1x1x32x128xf32> to vector<32x128xf32>
    %c20 = arith.constant 20 : index
    %183 = memref.load %arg5[%c20] : memref<32xf32, #tpu.memory_space<smem>>
    %184 = vector.broadcast %183 : f32 to vector<32x128xf32>
    %185 = arith.mulf %182, %184 : vector<32x128xf32>
    %c0_130 = arith.constant 0 : index
    %c1_131 = arith.constant 1 : index
    %c0_132 = arith.constant 0 : index
    %c0_133 = arith.constant 0 : index
    %186 = vector.load %arg2[%c0_130, %c1_131, %c0_132, %c0_133] : memref<1x4x32x128xf32, #tpu.memory_space<vmem>>, vector<1x1x32x128xf32>
    %187 = vector.shape_cast %186 : vector<1x1x32x128xf32> to vector<32x128xf32>
    %c21 = arith.constant 21 : index
    %188 = memref.load %arg5[%c21] : memref<32xf32, #tpu.memory_space<smem>>
    %189 = vector.broadcast %188 : f32 to vector<32x128xf32>
    %190 = arith.mulf %187, %189 : vector<32x128xf32>
    %191 = arith.addf %185, %190 : vector<32x128xf32>
    %c0_134 = arith.constant 0 : index
    %c2_135 = arith.constant 2 : index
    %c0_136 = arith.constant 0 : index
    %c0_137 = arith.constant 0 : index
    %192 = vector.load %arg2[%c0_134, %c2_135, %c0_136, %c0_137] : memref<1x4x32x128xf32, #tpu.memory_space<vmem>>, vector<1x1x32x128xf32>
    %193 = vector.shape_cast %192 : vector<1x1x32x128xf32> to vector<32x128xf32>
    %c22 = arith.constant 22 : index
    %194 = memref.load %arg5[%c22] : memref<32xf32, #tpu.memory_space<smem>>
    %195 = vector.broadcast %194 : f32 to vector<32x128xf32>
    %196 = arith.mulf %193, %195 : vector<32x128xf32>
    %197 = arith.addf %191, %196 : vector<32x128xf32>
    %c0_138 = arith.constant 0 : index
    %c3_139 = arith.constant 3 : index
    %c0_140 = arith.constant 0 : index
    %c0_141 = arith.constant 0 : index
    %198 = vector.load %arg2[%c0_138, %c3_139, %c0_140, %c0_141] : memref<1x4x32x128xf32, #tpu.memory_space<vmem>>, vector<1x1x32x128xf32>
    %199 = vector.shape_cast %198 : vector<1x1x32x128xf32> to vector<32x128xf32>
    %c23 = arith.constant 23 : index
    %200 = memref.load %arg5[%c23] : memref<32xf32, #tpu.memory_space<smem>>
    %201 = vector.broadcast %200 : f32 to vector<32x128xf32>
    %202 = arith.mulf %199, %201 : vector<32x128xf32>
    %203 = arith.addf %197, %202 : vector<32x128xf32>
    %204 = arith.mulf %30, %203 : vector<32x128xf32>
    %c5_142 = arith.constant 5 : index
    %205 = memref.load %arg6[%c5_142] : memref<8xf32, #tpu.memory_space<smem>>
    %206 = vector.broadcast %205 : f32 to vector<32x128xf32>
    %207 = arith.addf %204, %206 : vector<32x128xf32>
    %c0_143 = arith.constant 0 : index
    %c5_144 = arith.constant 5 : index
    %c0_145 = arith.constant 0 : index
    %c0_146 = arith.constant 0 : index
    %208 = vector.load %arg7[%c0_143, %c5_144, %c0_145, %c0_146] : memref<1x8x32x128xf32, #tpu.memory_space<vmem>>, vector<1x1x32x128xf32>
    %209 = vector.shape_cast %208 : vector<1x1x32x128xf32> to vector<32x128xf32>
    %210 = vector.shape_cast %207 : vector<32x128xf32> to vector<1x1x32x128xf32>
    tpu.vector_store %arg7[%c0_143, %c5_144, %c0_145, %c0_146], %210 {strides = array<i32>} : memref<1x8x32x128xf32, #tpu.memory_space<vmem>>, vector<1x1x32x128xf32>,
    %c0_147 = arith.constant 0 : index
    %c0_148 = arith.constant 0 : index
    %c0_149 = arith.constant 0 : index
    %c0_150 = arith.constant 0 : index
    %211 = vector.load %arg2[%c0_147, %c0_148, %c0_149, %c0_150] : memref<1x4x32x128xf32, #tpu.memory_space<vmem>>, vector<1x1x32x128xf32>
    %212 = vector.shape_cast %211 : vector<1x1x32x128xf32> to vector<32x128xf32>
    %c24 = arith.constant 24 : index
    %213 = memref.load %arg5[%c24] : memref<32xf32, #tpu.memory_space<smem>>
    %214 = vector.broadcast %213 : f32 to vector<32x128xf32>
    %215 = arith.mulf %212, %214 : vector<32x128xf32>
    %c0_151 = arith.constant 0 : index
    %c1_152 = arith.constant 1 : index
    %c0_153 = arith.constant 0 : index
    %c0_154 = arith.constant 0 : index
    %216 = vector.load %arg2[%c0_151, %c1_152, %c0_153, %c0_154] : memref<1x4x32x128xf32, #tpu.memory_space<vmem>>, vector<1x1x32x128xf32>
    %217 = vector.shape_cast %216 : vector<1x1x32x128xf32> to vector<32x128xf32>
    %c25 = arith.constant 25 : index
    %218 = memref.load %arg5[%c25] : memref<32xf32, #tpu.memory_space<smem>>
    %219 = vector.broadcast %218 : f32 to vector<32x128xf32>
    %220 = arith.mulf %217, %219 : vector<32x128xf32>
    %221 = arith.addf %215, %220 : vector<32x128xf32>
    %c0_155 = arith.constant 0 : index
    %c2_156 = arith.constant 2 : index
    %c0_157 = arith.constant 0 : index
    %c0_158 = arith.constant 0 : index
    %222 = vector.load %arg2[%c0_155, %c2_156, %c0_157, %c0_158] : memref<1x4x32x128xf32, #tpu.memory_space<vmem>>, vector<1x1x32x128xf32>
    %223 = vector.shape_cast %222 : vector<1x1x32x128xf32> to vector<32x128xf32>
    %c26 = arith.constant 26 : index
    %224 = memref.load %arg5[%c26] : memref<32xf32, #tpu.memory_space<smem>>
    %225 = vector.broadcast %224 : f32 to vector<32x128xf32>
    %226 = arith.mulf %223, %225 : vector<32x128xf32>
    %227 = arith.addf %221, %226 : vector<32x128xf32>
    %c0_159 = arith.constant 0 : index
    %c3_160 = arith.constant 3 : index
    %c0_161 = arith.constant 0 : index
    %c0_162 = arith.constant 0 : index
    %228 = vector.load %arg2[%c0_159, %c3_160, %c0_161, %c0_162] : memref<1x4x32x128xf32, #tpu.memory_space<vmem>>, vector<1x1x32x128xf32>
    %229 = vector.shape_cast %228 : vector<1x1x32x128xf32> to vector<32x128xf32>
    %c27 = arith.constant 27 : index
    %230 = memref.load %arg5[%c27] : memref<32xf32, #tpu.memory_space<smem>>
    %231 = vector.broadcast %230 : f32 to vector<32x128xf32>
    %232 = arith.mulf %229, %231 : vector<32x128xf32>
    %233 = arith.addf %227, %232 : vector<32x128xf32>
    %234 = arith.mulf %30, %233 : vector<32x128xf32>
    %c6_163 = arith.constant 6 : index
    %235 = memref.load %arg6[%c6_163] : memref<8xf32, #tpu.memory_space<smem>>
    %236 = vector.broadcast %235 : f32 to vector<32x128xf32>
    %237 = arith.addf %234, %236 : vector<32x128xf32>
    %c0_164 = arith.constant 0 : index
    %c6_165 = arith.constant 6 : index
    %c0_166 = arith.constant 0 : index
    %c0_167 = arith.constant 0 : index
    %238 = vector.load %arg7[%c0_164, %c6_165, %c0_166, %c0_167] : memref<1x8x32x128xf32, #tpu.memory_space<vmem>>, vector<1x1x32x128xf32>
    %239 = vector.shape_cast %238 : vector<1x1x32x128xf32> to vector<32x128xf32>
    %240 = vector.shape_cast %237 : vector<32x128xf32> to vector<1x1x32x128xf32>
    tpu.vector_store %arg7[%c0_164, %c6_165, %c0_166, %c0_167], %240 {strides = array<i32>} : memref<1x8x32x128xf32, #tpu.memory_space<vmem>>, vector<1x1x32x128xf32>,
    %c0_168 = arith.constant 0 : index
    %c0_169 = arith.constant 0 : index
    %c0_170 = arith.constant 0 : index
    %c0_171 = arith.constant 0 : index
    %241 = vector.load %arg2[%c0_168, %c0_169, %c0_170, %c0_171] : memref<1x4x32x128xf32, #tpu.memory_space<vmem>>, vector<1x1x32x128xf32>
    %242 = vector.shape_cast %241 : vector<1x1x32x128xf32> to vector<32x128xf32>
    %c28 = arith.constant 28 : index
    %243 = memref.load %arg5[%c28] : memref<32xf32, #tpu.memory_space<smem>>
    %244 = vector.broadcast %243 : f32 to vector<32x128xf32>
    %245 = arith.mulf %242, %244 : vector<32x128xf32>
    %c0_172 = arith.constant 0 : index
    %c1_173 = arith.constant 1 : index
    %c0_174 = arith.constant 0 : index
    %c0_175 = arith.constant 0 : index
    %246 = vector.load %arg2[%c0_172, %c1_173, %c0_174, %c0_175] : memref<1x4x32x128xf32, #tpu.memory_space<vmem>>, vector<1x1x32x128xf32>
    %247 = vector.shape_cast %246 : vector<1x1x32x128xf32> to vector<32x128xf32>
    %c29 = arith.constant 29 : index
    %248 = memref.load %arg5[%c29] : memref<32xf32, #tpu.memory_space<smem>>
    %249 = vector.broadcast %248 : f32 to vector<32x128xf32>
    %250 = arith.mulf %247, %249 : vector<32x128xf32>
    %251 = arith.addf %245, %250 : vector<32x128xf32>
    %c0_176 = arith.constant 0 : index
    %c2_177 = arith.constant 2 : index
    %c0_178 = arith.constant 0 : index
    %c0_179 = arith.constant 0 : index
    %252 = vector.load %arg2[%c0_176, %c2_177, %c0_178, %c0_179] : memref<1x4x32x128xf32, #tpu.memory_space<vmem>>, vector<1x1x32x128xf32>
    %253 = vector.shape_cast %252 : vector<1x1x32x128xf32> to vector<32x128xf32>
    %c30 = arith.constant 30 : index
    %254 = memref.load %arg5[%c30] : memref<32xf32, #tpu.memory_space<smem>>
    %255 = vector.broadcast %254 : f32 to vector<32x128xf32>
    %256 = arith.mulf %253, %255 : vector<32x128xf32>
    %257 = arith.addf %251, %256 : vector<32x128xf32>
    %c0_180 = arith.constant 0 : index
    %c3_181 = arith.constant 3 : index
    %c0_182 = arith.constant 0 : index
    %c0_183 = arith.constant 0 : index
    %258 = vector.load %arg2[%c0_180, %c3_181, %c0_182, %c0_183] : memref<1x4x32x128xf32, #tpu.memory_space<vmem>>, vector<1x1x32x128xf32>
    %259 = vector.shape_cast %258 : vector<1x1x32x128xf32> to vector<32x128xf32>
    %c31 = arith.constant 31 : index
    %260 = memref.load %arg5[%c31] : memref<32xf32, #tpu.memory_space<smem>>
    %261 = vector.broadcast %260 : f32 to vector<32x128xf32>
    %262 = arith.mulf %259, %261 : vector<32x128xf32>
    %263 = arith.addf %257, %262 : vector<32x128xf32>
    %264 = arith.mulf %30, %263 : vector<32x128xf32>
    %c7_184 = arith.constant 7 : index
    %265 = memref.load %arg6[%c7_184] : memref<8xf32, #tpu.memory_space<smem>>
    %266 = vector.broadcast %265 : f32 to vector<32x128xf32>
    %267 = arith.addf %264, %266 : vector<32x128xf32>
    %c0_185 = arith.constant 0 : index
    %c7_186 = arith.constant 7 : index
    %c0_187 = arith.constant 0 : index
    %c0_188 = arith.constant 0 : index
    %268 = vector.load %arg7[%c0_185, %c7_186, %c0_187, %c0_188] : memref<1x8x32x128xf32, #tpu.memory_space<vmem>>, vector<1x1x32x128xf32>
    %269 = vector.shape_cast %268 : vector<1x1x32x128xf32> to vector<32x128xf32>
    %270 = vector.shape_cast %267 : vector<32x128xf32> to vector<1x1x32x128xf32>
    tpu.vector_store %arg7[%c0_185, %c7_186, %c0_187, %c0_188], %270 {strides = array<i32>} : memref<1x8x32x128xf32, #tpu.memory_space<vmem>>, vector<1x1x32x128xf32>,
    return
  }
  func.func @transform_0(%arg0: i32, %arg1: i32) -> (i32, i32, i32, i32) {
    %c0_i32 = arith.constant 0 : i32
    %c0_i32_0 = arith.constant 0 : i32
    %c0_i32_1 = arith.constant 0 : i32
    return %arg0, %c0_i32, %arg1, %c0_i32_0 : i32, i32, i32, i32
  }
  func.func @transform_1(%arg0: i32, %arg1: i32) -> i32 {
    %c0_i32 = arith.constant 0 : i32
    %c0_i32_0 = arith.constant 0 : i32
    return %c0_i32 : i32
  }
  func.func @transform_2(%arg0: i32, %arg1: i32) -> i32 {
    %c0_i32 = arith.constant 0 : i32
    %c0_i32_0 = arith.constant 0 : i32
    return %c0_i32 : i32
  }
  func.func @transform_3(%arg0: i32, %arg1: i32) -> i32 {
    %c0_i32 = arith.constant 0 : i32
    %c0_i32_0 = arith.constant 0 : i32
    return %c0_i32 : i32
  }
  func.func @transform_4(%arg0: i32, %arg1: i32) -> i32 {
    %c0_i32 = arith.constant 0 : i32
    %c0_i32_0 = arith.constant 0 : i32
    return %c0_i32 : i32
  }
  func.func @transform_5(%arg0: i32, %arg1: i32) -> (i32, i32, i32, i32) {
    %c0_i32 = arith.constant 0 : i32
    %c0_i32_0 = arith.constant 0 : i32
    %c0_i32_1 = arith.constant 0 : i32
    return %arg0, %c0_i32, %arg1, %c0_i32_0 : i32, i32, i32, i32
  }
}

</mosaic_0001>

<llo_original>
// kernel: tpu_custom_call.1
$region0: #{tpu_custom_call.1}
  #allocation0 [shape = 'u32[]', space=smem, size = 0x4, offset = 0x4, fixed_abs, tag = 'smem constant byte address 0x4 - core index']
  #allocation1 [shape = 'u32[144,128]{1,0:T(1,128)}', space=vmem, size = 0x12000, scoped, tag = 'internal scratch']
  #allocation2 [shape = 'f32[1]{0:T(128)S(6)}', space=smem, size = 0x200, scoped, tag = 'scoped memory for tpu_custom_call.1']
  %s0 = inlined_call_operand.hbm [shape: f32[2,4,32,128], index: 0, kind: input, shape index: {}]
  %s1 = inlined_call_operand.vmem [shape: f32[4], index: 1, kind: input, shape index: {}]
  %s2 = inlined_call_operand.<no memory space> [shape: f32[1], index: 2, kind: input, shape index: {}]
  %s3 = inlined_call_operand.vmem [shape: f32[32], index: 3, kind: input, shape index: {}]
  %s4 = inlined_call_operand.vmem [shape: f32[8], index: 4, kind: input, shape index: {}]
  %s5 = inlined_call_operand.hbm [shape: f32[2,8,32,128], index: 5, kind: output, shape index: {}]
  %s6 = sld [smem:[#allocation0]]
  $region69: #{tpu_custom_call.1} parent=0
    _
  %s8 = ssub.s32 1, %s6
  %s9 = scalar_select 0, %s8, %s6
  %10 = sst [smem:[#allocation2]] %s2
  $region1: #{tpu_custom_call.1} parent=0
    #allocation3 [shape = 'u8[131072]{0}', space=vmem, size = 0x20000, scoped, tag = 'input window, operand 0']
    #allocation4 [shape = 's32[2]{0}', space=sflag, size = 0x8, scoped, tag = 'scoped memory for tpu_custom_call.1']
    #allocation5 [shape = 's32[2]{0}', space=sflag, size = 0x8, scoped, tag = 'scoped memory for tpu_custom_call.1']
    #allocation6 [shape = 's32[2]{0}', space=sflag, size = 0x8, scoped, tag = 'scoped memory for tpu_custom_call.1']
    #allocation7 [shape = 'u8[512]{0}', space=smem, size = 0x200, scoped, tag = 'input window, operand 1, single buffered']
    #allocation8 [shape = 'u8[512]{0}', space=smem, size = 0x200, scoped, tag = 'input window, operand 3, single buffered']
    #allocation9 [shape = 's32[1]{0}', space=sflag, size = 0x4, scoped, tag = 'scoped memory for tpu_custom_call.1']
    #allocation10 [shape = 'u8[512]{0}', space=smem, size = 0x200, scoped, tag = 'input window, operand 4, single buffered']
    #allocation11 [shape = 'u8[262144]{0}', space=vmem, size = 0x40000, scoped, tag = 'output window, operand 0']
    %11 = vsyncpa [#allocation4], 0
    %s12 = scalar_lea.sflag [#allocation4], 1
    %13 = vsyncpa %s12, 0
    %14 = vsyncpa [#allocation6], 0
    %15 = vsyncpa [#allocation9], 0
    %16 = vsyncpa [#allocation5], 0
    %s17 = scalar_lea.sflag [#allocation5], 1
    %18 = vsyncpa %s17, 0
    loop: start=0, step=1, limit=4
    $region2: #{tpu_custom_call.1} parent=1 // loop_pre_header
      _
    $region3: #{tpu_custom_call.1} parent=1 // loop_header
      %s20 = sphi 0, %s24
      %p21 = scmp.ge.s32.totalorder %s20, 4
      %s27 = sphi 0, %s39
      %s28 = sphi 0, %s35
      %s29 = sphi 0, %s27
      %s30 = sphi 0, %s28
      %s31 = sphi 0, %s29
      %s32 = sphi 0, %s30
      %s44 = sphi 0, %s46
      %s47 = sphi 0, %s44
      %s48 = sphi 0, %s47
      %s64 = sphi 0, %s48
      %s68 = sphi 0, %s68
      %s70 = sphi 0, %s68
      %s71 = sphi 0, %s70
      %s85 = sphi 0, %s71
      %s89 = sphi 0, %s89
      %s91 = sphi 0, %s89
      %s92 = sphi 0, %s91
      %s106 = sphi 0, %s92
      %s110 = sphi 0, %s110
      %s112 = sphi 0, %s110
      %s113 = sphi 0, %s112
      %s127 = sphi 0, %s113
      %s131 = sphi 0, %s131
      %s133 = sphi 0, %s131
      %s134 = sphi 0, %s133
      %s148 = sphi 0, %s134
      %s156 = sphi 0, %s158
      %s159 = sphi 0, %s156
      %s160 = sphi 0, %s159
      %s176 = sphi 0, %s160
    $region4: #{tpu_custom_call.1} parent=1 // loop_header_branch
      %23 = sbr.rel (%p21) target = $region8
    $region5: #{tpu_custom_call.1} parent=1 // loop_body
      %s25 = ssub.s32 %s20, 1
      %s26 = ssub.s32 %s20, 2
      %s33 = sadd.s32 1, %s28
      %p34 = scmp.ge.s32.totalorder %s33, 1
      %s35 = scalar_select %p34, 0, %s33
      %s36 = sadd.s32 1, %s27
      %s37 = scalar_select %p34, %s36, %s27
      %p38 = scmp.ge.s32.totalorder %s37, 2
      %s39 = scalar_select %p38, 0, %s37
      %s40 = ssub.s32 %s27, %s39
      %s41 = ssub.s32 %s28, %s35
      %s42 = sor.u32 %s40, %s41
      %p43 = scmp.eq.s32.totalorder %s42, 0
      %s45 = sadd.s32 %s44, 1
      %s46 = scalar_select %p43, %s44, %s45
      %p49 = pneg %p43
      %p50 = scmp.eq.s32.totalorder %s20, 1
      %p51 = por %p49, %p50
      %p52 = scmp.ne.s32.totalorder %s44, %s47
      %p53 = scmp.eq.s32.totalorder %s20, 0
      %p54 = por %p52, %p53
      %p55 = scmp.ne.s32.totalorder %s44, %s47
      %p56 = scmp.eq.s32.totalorder %s25, 1
      %p57 = por %p55, %p56
      %p58 = scmp.ne.s32.totalorder %s47, %s48
      %p59 = scmp.eq.s32.totalorder %s25, 0
      %p60 = por %p58, %p59
      %p61 = scmp.ne.s32.totalorder %s47, %s48
      %p62 = scmp.eq.s32.totalorder %s26, 1
      %p63 = por %p61, %p62
      %p65 = scmp.ne.s32.totalorder %s48, %s64
      %p66 = scmp.eq.s32.totalorder %s26, 0
      %p67 = por %p65, %p66
      %s69 = sadd.s32 %s68, 1
      %p72 = scmp.eq.s32.totalorder %s20, 1
      %p73 = scmp.ne.s32.totalorder %s68, %s70
      %p74 = scmp.eq.s32.totalorder %s20, 0
      %p75 = por %p73, %p74
      %p76 = scmp.ne.s32.totalorder %s68, %s70
      %p77 = scmp.eq.s32.totalorder %s25, 1
      %p78 = por %p76, %p77
      %p79 = scmp.ne.s32.totalorder %s70, %s71
      %p80 = scmp.eq.s32.totalorder %s25, 0
      %p81 = por %p79, %p80
      %p82 = scmp.ne.s32.totalorder %s70, %s71
      %p83 = scmp.eq.s32.totalorder %s26, 1
      %p84 = por %p82, %p83
      %p86 = scmp.ne.s32.totalorder %s71, %s85
      %p87 = scmp.eq.s32.totalorder %s26, 0
      %p88 = por %p86, %p87
      %s90 = sadd.s32 %s89, 1
      %p93 = scmp.eq.s32.totalorder %s20, 1
      %p94 = scmp.ne.s32.totalorder %s89, %s91
      %p95 = scmp.eq.s32.totalorder %s20, 0
      %p96 = por %p94, %p95
      %p97 = scmp.ne.s32.totalorder %s89, %s91
      %p98 = scmp.eq.s32.totalorder %s25, 1
      %p99 = por %p97, %p98
      %p100 = scmp.ne.s32.totalorder %s91, %s92
      %p101 = scmp.eq.s32.totalorder %s25, 0
      %p102 = por %p100, %p101
      %p103 = scmp.ne.s32.totalorder %s91, %s92
      %p104 = scmp.eq.s32.totalorder %s26, 1
      %p105 = por %p103, %p104
      %p107 = scmp.ne.s32.totalorder %s92, %s106
      %p108 = scmp.eq.s32.totalorder %s26, 0
      %p109 = por %p107, %p108
      %s111 = sadd.s32 %s110, 1
      %p114 = scmp.eq.s32.totalorder %s20, 1
      %p115 = scmp.ne.s32.totalorder %s110, %s112
      %p116 = scmp.eq.s32.totalorder %s20, 0
      %p117 = por %p115, %p116
      %p118 = scmp.ne.s32.totalorder %s110, %s112
      %p119 = scmp.eq.s32.totalorder %s25, 1
      %p120 = por %p118, %p119
      %p121 = scmp.ne.s32.totalorder %s112, %s113
      %p122 = scmp.eq.s32.totalorder %s25, 0
      %p123 = por %p121, %p122
      %p124 = scmp.ne.s32.totalorder %s112, %s113
      %p125 = scmp.eq.s32.totalorder %s26, 1
      %p126 = por %p124, %p125
      %p128 = scmp.ne.s32.totalorder %s113, %s127
      %p129 = scmp.eq.s32.totalorder %s26, 0
      %p130 = por %p128, %p129
      %s132 = sadd.s32 %s131, 1
      %p135 = scmp.eq.s32.totalorder %s20, 1
      %p136 = scmp.ne.s32.totalorder %s131, %s133
      %p137 = scmp.eq.s32.totalorder %s20, 0
      %p138 = por %p136, %p137
      %p139 = scmp.ne.s32.totalorder %s131, %s133
      %p140 = scmp.eq.s32.totalorder %s25, 1
      %p141 = por %p139, %p140
      %p142 = scmp.ne.s32.totalorder %s133, %s134
      %p143 = scmp.eq.s32.totalorder %s25, 0
      %p144 = por %p142, %p143
      %p145 = scmp.ne.s32.totalorder %s133, %s134
      %p146 = scmp.eq.s32.totalorder %s26, 1
      %p147 = por %p145, %p146
      %p149 = scmp.ne.s32.totalorder %s134, %s148
      %p150 = scmp.eq.s32.totalorder %s26, 0
      %p151 = por %p149, %p150
      %s152 = ssub.s32 %s27, %s39
      %s153 = ssub.s32 %s28, %s35
      %s154 = sor.u32 %s152, %s153
      %p155 = scmp.eq.s32.totalorder %s154, 0
      %s157 = sadd.s32 %s156, 1
      %s158 = scalar_select %p155, %s156, %s157
      %p161 = pneg %p155
      %p162 = scmp.eq.s32.totalorder %s20, 1
      %p163 = por %p161, %p162
      %p164 = scmp.ne.s32.totalorder %s156, %s159
      %p165 = scmp.eq.s32.totalorder %s20, 0
      %p166 = por %p164, %p165
      %p167 = scmp.ne.s32.totalorder %s156, %s159
      %p168 = scmp.eq.s32.totalorder %s25, 1
      %p169 = por %p167, %p168
      %p170 = scmp.ne.s32.totalorder %s159, %s160
      %p171 = scmp.eq.s32.totalorder %s25, 0
      %p172 = por %p170, %p171
      %p173 = scmp.ne.s32.totalorder %s159, %s160
      %p174 = scmp.eq.s32.totalorder %s26, 1
      %p175 = por %p173, %p174
      %p177 = scmp.ne.s32.totalorder %s160, %s176
      %p178 = scmp.eq.s32.totalorder %s26, 0
      %p179 = por %p177, %p178
      %p180 = scmp.le.s32.totalorder 1, %s20
      %p181 = scmp.lt.s32.totalorder %s20, 3
      %p182 = pnand %p180, %p181
      %p183 = pneg %p182
      // Predicated region
      $region9: #{tpu_custom_call.1} parent=5 // pred_check
        _
      $region10: #{tpu_custom_call.1} parent=5 // pred_check_branch
        %185 = sbr.rel (%p182) target = $region12
      $region11: #{tpu_custom_call.1} parent=5 // pred_region
        %s186 = ssub.s32 %s20, 1
        // Predicated region
        $region13: #{tpu_custom_call.1} parent=11 // pred_check
          %p187 = pneg %p81
        $region14: #{tpu_custom_call.1} parent=11 // pred_check_branch
          %189 = sbr.rel (%p187) target = $region16
        $region15: #{tpu_custom_call.1} parent=11 // pred_region
          %s191 = ssub.s32 16, 16
          %192 = vsyncadd [#allocation6], %s191
          %s194 = sshll.u32 %s1, 4
          %s195 = int_to_ptr.vmem [resolvable:$true] %s194
          %197 = dma.vmem_to_smem %s195, 16, [#allocation7], [#allocation6]
        $region16: #{tpu_custom_call.1} parent=11 // pred_fallthru
          _
        // Predicated region
        $region17: #{tpu_custom_call.1} parent=11 // pred_check
          %p198 = pneg %p102
        $region18: #{tpu_custom_call.1} parent=11 // pred_check_branch
          %200 = sbr.rel (%p198) target = $region20
        $region19: #{tpu_custom_call.1} parent=11 // pred_region
          _
        $region20: #{tpu_custom_call.1} parent=11 // pred_fallthru
          _
        // Predicated region
        $region21: #{tpu_custom_call.1} parent=11 // pred_check
          %p201 = pneg %p123
        $region22: #{tpu_custom_call.1} parent=11 // pred_check_branch
          %203 = sbr.rel (%p201) target = $region24
        $region23: #{tpu_custom_call.1} parent=11 // pred_region
          %s205 = ssub.s32 16, 16
          %206 = vsyncadd [#allocation9], %s205
          %s208 = sshll.u32 %s3, 4
          %s209 = int_to_ptr.vmem [resolvable:$true] %s208
          %211 = dma.vmem_to_smem %s209, 16, [#allocation8], [#allocation9]
        $region24: #{tpu_custom_call.1} parent=11 // pred_fallthru
          _
        // Predicated region
        $region25: #{tpu_custom_call.1} parent=11 // pred_check
          %p212 = pneg %p144
        $region26: #{tpu_custom_call.1} parent=11 // pred_check_branch
          %214 = sbr.rel (%p212) target = $region28
        $region27: #{tpu_custom_call.1} parent=11 // pred_region
          %s216 = ssub.s32 16, 16
          %217 = vsyncadd [#allocation9], %s216
          %s219 = sshll.u32 %s4, 4
          %s220 = int_to_ptr.vmem [resolvable:$true] %s219
          %222 = dma.vmem_to_smem %s220, 16, [#allocation10], [#allocation9]
        $region28: #{tpu_custom_call.1} parent=11 // pred_fallthru
          _
      $region12: #{tpu_custom_call.1} parent=5 // pred_fallthru
        _
      %p223 = scmp.lt.s32.totalorder %s20, 2
      // Predicated region
      $region29: #{tpu_custom_call.1} parent=5 // pred_check
        %p224 = pneg %p223
      $region30: #{tpu_custom_call.1} parent=5 // pred_check_branch
        %226 = sbr.rel (%p224) target = $region32
      $region31: #{tpu_custom_call.1} parent=5 // pred_region
        // Predicated region
        $region33: #{tpu_custom_call.1} parent=31 // pred_check
          %p227 = pneg %p54
        $region34: #{tpu_custom_call.1} parent=31 // pred_check_branch
          %229 = sbr.rel (%p227) target = $region36
        $region35: #{tpu_custom_call.1} parent=31 // pred_region
          %s230 = sand.u32 %s44, 1
          %s231 = scalar_lea.sflag [#allocation4], %s230
          %s232 = sand.u32 %s44, 1
          %s233 = smul.addr %s232, 128
          %s234 = scalar_lea.vmem [#allocation3], %s233
          %s235 = smul.u32 4, %s28
          %s237 = ssub.s32 2048, 2048
          %238 = vsyncadd %s231, %s237
          %s239 = smul.addr %s27, 16
          %s240 = sadd.s32 %s235, %s239
          %s241 = smul.addr %s240, 128
          %s242 = scalar_lea.hbm %s0, %s241
          %s243 = sshll.u32 %s234, 4
          %s244 = int_to_ptr.vmem [resolvable:$true] %s243
          %249 = dma.hbm_to_vmem [thread:$0]  %s242, 2048, %s244, %s231, 128, 128, 8
        $region36: #{tpu_custom_call.1} parent=31 // pred_fallthru
          _
      $region32: #{tpu_custom_call.1} parent=5 // pred_fallthru
        _
      %p250 = scmp.le.s32.totalorder 1, %s20
      %p251 = scmp.lt.s32.totalorder %s20, 3
      %p252 = pnand %p250, %p251
      %p253 = pneg %p252
      // Predicated region
      $region37: #{tpu_custom_call.1} parent=5 // pred_check
        _
      $region38: #{tpu_custom_call.1} parent=5 // pred_check_branch
        %255 = sbr.rel (%p252) target = $region40
      $region39: #{tpu_custom_call.1} parent=5 // pred_region
        %s256 = ssub.s32 %s20, 1
        %s257 = sand.u32 %s47, 1
        %s258 = scalar_lea.sflag [#allocation4], %s257
        %s259 = sand.u32 %s47, 1
        %s260 = smul.addr %s259, 128
        %s261 = scalar_lea.vmem [#allocation3], %s260
        // Predicated region
        $region41: #{tpu_custom_call.1} parent=39 // pred_check
          %p262 = pneg %p60
        $region42: #{tpu_custom_call.1} parent=39 // pred_check_branch
          %264 = sbr.rel (%p262) target = $region44
        $region43: #{tpu_custom_call.1} parent=39 // pred_region
          %265 = dma.done %s258, 2048
        $region44: #{tpu_custom_call.1} parent=39 // pred_fallthru
          _
        // Predicated region
        $region45: #{tpu_custom_call.1} parent=39 // pred_check
          %p266 = pneg %p81
        $region46: #{tpu_custom_call.1} parent=39 // pred_check_branch
          %268 = sbr.rel (%p266) target = $region48
        $region47: #{tpu_custom_call.1} parent=39 // pred_region
          %269 = dma.done [#allocation6], 16
        $region48: #{tpu_custom_call.1} parent=39 // pred_fallthru
          _
        // Predicated region
        $region49: #{tpu_custom_call.1} parent=39 // pred_check
          %p270 = pneg %p123
        $region50: #{tpu_custom_call.1} parent=39 // pred_check_branch
          %272 = sbr.rel (%p270) target = $region52
        $region51: #{tpu_custom_call.1} parent=39 // pred_region
          %273 = dma.done [#allocation9], 16
        $region52: #{tpu_custom_call.1} parent=39 // pred_fallthru
          _
        // Predicated region
        $region53: #{tpu_custom_call.1} parent=39 // pred_check
          %p274 = pneg %p144
        $region54: #{tpu_custom_call.1} parent=39 // pred_check_branch
          %276 = sbr.rel (%p274) target = $region56
        $region55: #{tpu_custom_call.1} parent=39 // pred_region
          %277 = dma.done [#allocation9], 16
        $region56: #{tpu_custom_call.1} parent=39 // pred_fallthru
          _
        %278 = sfence
        %s279 = sand.u32 %s47, 1
        %s280 = scalar_lea.sflag [#allocation4], %s279
        %s281 = sand.u32 %s47, 1
        %s282 = smul.addr %s281, 128
        %s283 = scalar_lea.vmem [#allocation3], %s282
        %p284 = pneg %p60
        %p285 = pneg %p57
        %p286 = pneg %p81
        %p287 = pneg %p78
        %p288 = pneg %p102
        %p289 = pneg %p99
        %p290 = pneg %p123
        %p291 = pneg %p120
        %p292 = pneg %p144
        %p293 = pneg %p141
        %p294 = pneg %p172
        %p295 = pneg %p169
        %s296 = sand.u32 %s159, 1
        %s297 = scalar_lea.sflag [#allocation5], %s296
        %s298 = sand.u32 %s159, 1
        %s299 = smul.addr %s298, 256
        %s300 = scalar_lea.vmem [#allocation11], %s299
        %s301 = smul.u32 4, %s30
        %s302 = smul.u32 4, %s30
        %v303 = vld [vmem:[%s261] sm:$0xff]
        %v304 = vld [vmem:[%s261 + $0x8] sm:$0xff]
        %v305 = vld [vmem:[%s261 + $0x10] sm:$0xff]
        %v306 = vld [vmem:[%s261 + $0x18] sm:$0xff]
        %s307 = sld [smem:[#allocation7]]
        %v308 = vstv %s307
        %v309 = vmul.f32 %v303, %v308
        %v310 = vmul.f32 %v304, %v308
        %v311 = vmul.f32 %v305, %v308
        %v312 = vmul.f32 %v306, %v308
        %s313 = scalar_lea.vmem %s261, 32 [#allocation3]
        %v314 = vld [vmem:[%s313] sm:$0xff]
        %v315 = vld [vmem:[%s313 + $0x8] sm:$0xff]
        %v316 = vld [vmem:[%s313 + $0x10] sm:$0xff]
        %v317 = vld [vmem:[%s313 + $0x18] sm:$0xff]
        %s318 = sld [smem:[#allocation7 + $0x1]]
        %v319 = vstv %s318
        %v320 = vmul.f32 %v314, %v319
        %v321 = vmul.f32 %v315, %v319
        %v322 = vmul.f32 %v316, %v319
        %v323 = vmul.f32 %v317, %v319
        %v324 = vadd.f32 %v309, %v320
        %v325 = vadd.f32 %v310, %v321
        %v326 = vadd.f32 %v311, %v322
        %v327 = vadd.f32 %v312, %v323
        %s328 = scalar_lea.vmem %s261, 64 [#allocation3]
        %v329 = vld [vmem:[%s328] sm:$0xff]
        %v330 = vld [vmem:[%s328 + $0x8] sm:$0xff]
        %v331 = vld [vmem:[%s328 + $0x10] sm:$0xff]
        %v332 = vld [vmem:[%s328 + $0x18] sm:$0xff]
        %s333 = sld [smem:[#allocation7 + $0x2]]
        %v334 = vstv %s333
        %v335 = vmul.f32 %v329, %v334
        %v336 = vmul.f32 %v330, %v334
        %v337 = vmul.f32 %v331, %v334
        %v338 = vmul.f32 %v332, %v334
        %v339 = vadd.f32 %v324, %v335
        %v340 = vadd.f32 %v325, %v336
        %v341 = vadd.f32 %v326, %v337
        %v342 = vadd.f32 %v327, %v338
        %s343 = scalar_lea.vmem %s261, 96 [#allocation3]
        %v344 = vld [vmem:[%s343] sm:$0xff]
        %v345 = vld [vmem:[%s343 + $0x8] sm:$0xff]
        %v346 = vld [vmem:[%s343 + $0x10] sm:$0xff]
        %v347 = vld [vmem:[%s343 + $0x18] sm:$0xff]
        %s348 = sld [smem:[#allocation7 + $0x3]]
        %v349 = vstv %s348
        %v350 = vmul.f32 %v344, %v349
        %v351 = vmul.f32 %v345, %v349
        %v352 = vmul.f32 %v346, %v349
        %v353 = vmul.f32 %v347, %v349
        %v354 = vadd.f32 %v339, %v350
        %v355 = vadd.f32 %v340, %v351
        %v356 = vadd.f32 %v341, %v352
        %v357 = vadd.f32 %v342, %v353
        %s358 = sld [smem:[#allocation2]]
        %v359 = vstv %s358
        %v360 = vadd.f32 %v354, %v359
        %v361 = vadd.f32 %v355, %v359
        %v362 = vadd.f32 %v356, %v359
        %v363 = vadd.f32 %v357, %v359
        %v364 = vxor.u32 %v360, 2147483648
        %v365 = vxor.u32 %v361, 2147483648
        %v366 = vxor.u32 %v362, 2147483648
        %v367 = vxor.u32 %v363, 2147483648
        %v368 = vmul.f32 %v364, 1.442695
        %v369 = vpow.pop %v368
        %v370 = vmul.f32 %v365, 1.442695
        %v371 = vpow.pop %v370
        %v372 = vmul.f32 %v366, 1.442695
        %v373 = vpow.pop %v372
        %v374 = vmul.f32 %v367, 1.442695
        %v375 = vpow.pop %v374
        %v376 = vadd.f32 %v369, 1.0
        %v377 = vadd.f32 %v371, 1.0
        %v378 = vadd.f32 %v373, 1.0
        %v379 = vadd.f32 %v375, 1.0
        %v380 = vrcp.pop %v376
        %v381 = vmul.f32 1.0, %v380
        %v382 = vrcp.pop %v377
        %v383 = vmul.f32 1.0, %v382
        %v384 = vrcp.pop %v378
        %v385 = vmul.f32 1.0, %v384
        %v386 = vrcp.pop %v379
        %v387 = vmul.f32 1.0, %v386
        %s388 = sld [smem:[#allocation8]]
        %v389 = vstv %s388
        %v390 = vmul.f32 %v303, %v389
        %v391 = vmul.f32 %v304, %v389
        %v392 = vmul.f32 %v305, %v389
        %v393 = vmul.f32 %v306, %v389
        %s394 = sld [smem:[#allocation8 + $0x1]]
        %v395 = vstv %s394
        %v396 = vmul.f32 %v314, %v395
        %v397 = vmul.f32 %v315, %v395
        %v398 = vmul.f32 %v316, %v395
        %v399 = vmul.f32 %v317, %v395
        %v400 = vadd.f32 %v390, %v396
        %v401 = vadd.f32 %v391, %v397
        %v402 = vadd.f32 %v392, %v398
        %v403 = vadd.f32 %v393, %v399
        %s404 = sld [smem:[#allocation8 + $0x2]]
        %v405 = vstv %s404
        %v406 = vmul.f32 %v329, %v405
        %v407 = vmul.f32 %v330, %v405
        %v408 = vmul.f32 %v331, %v405
        %v409 = vmul.f32 %v332, %v405
        %v410 = vadd.f32 %v400, %v406
        %v411 = vadd.f32 %v401, %v407
        %v412 = vadd.f32 %v402, %v408
        %v413 = vadd.f32 %v403, %v409
        %s414 = sld [smem:[#allocation8 + $0x3]]
        %v415 = vstv %s414
        %v416 = vmul.f32 %v344, %v415
        %v417 = vmul.f32 %v345, %v415
        %v418 = vmul.f32 %v346, %v415
        %v419 = vmul.f32 %v347, %v415
        %v420 = vadd.f32 %v410, %v416
        %v421 = vadd.f32 %v411, %v417
        %v422 = vadd.f32 %v412, %v418
        %v423 = vadd.f32 %v413, %v419
        %v424 = vmul.f32 %v381, %v420
        %v425 = vmul.f32 %v383, %v421
        %v426 = vmul.f32 %v385, %v422
        %v427 = vmul.f32 %v387, %v423
        %s428 = sld [smem:[#allocation10]]
        %v429 = vstv %s428
        %v430 = vadd.f32 %v424, %v429
        %v431 = vadd.f32 %v425, %v429
        %v432 = vadd.f32 %v426, %v429
        %v433 = vadd.f32 %v427, %v429
        %434 = vst [vmem:[%s300] sm:$0xff] %v430
        %435 = vst [vmem:[%s300 + $0x8] sm:$0xff] %v431
        %436 = vst [vmem:[%s300 + $0x10] sm:$0xff] %v432
        %437 = vst [vmem:[%s300 + $0x18] sm:$0xff] %v433
        %v438 = vld [vmem:[%s261] sm:$0xff]
        %v439 = vld [vmem:[%s261 + $0x8] sm:$0xff]
        %v440 = vld [vmem:[%s261 + $0x10] sm:$0xff]
        %v441 = vld [vmem:[%s261 + $0x18] sm:$0xff]
        %s442 = sld [smem:[#allocation8 + $0x4]]
        %v443 = vstv %s442
        %v444 = vmul.f32 %v438, %v443
        %v445 = vmul.f32 %v439, %v443
        %v446 = vmul.f32 %v440, %v443
        %v447 = vmul.f32 %v441, %v443
        %v448 = vld [vmem:[%s313] sm:$0xff]
        %v449 = vld [vmem:[%s313 + $0x8] sm:$0xff]
        %v450 = vld [vmem:[%s313 + $0x10] sm:$0xff]
        %v451 = vld [vmem:[%s313 + $0x18] sm:$0xff]
        %s452 = sld [smem:[#allocation8 + $0x5]]
        %v453 = vstv %s452
        %v454 = vmul.f32 %v448, %v453
        %v455 = vmul.f32 %v449, %v453
        %v456 = vmul.f32 %v450, %v453
        %v457 = vmul.f32 %v451, %v453
        %v458 = vadd.f32 %v444, %v454
        %v459 = vadd.f32 %v445, %v455
        %v460 = vadd.f32 %v446, %v456
        %v461 = vadd.f32 %v447, %v457
        %v462 = vld [vmem:[%s328] sm:$0xff]
        %v463 = vld [vmem:[%s328 + $0x8] sm:$0xff]
        %v464 = vld [vmem:[%s328 + $0x10] sm:$0xff]
        %v465 = vld [vmem:[%s328 + $0x18] sm:$0xff]
        %s466 = sld [smem:[#allocation8 + $0x6]]
        %v467 = vstv %s466
        %v468 = vmul.f32 %v462, %v467
        %v469 = vmul.f32 %v463, %v467
        %v470 = vmul.f32 %v464, %v467
        %v471 = vmul.f32 %v465, %v467
        %v472 = vadd.f32 %v458, %v468
        %v473 = vadd.f32 %v459, %v469
        %v474 = vadd.f32 %v460, %v470
        %v475 = vadd.f32 %v461, %v471
        %v476 = vld [vmem:[%s343] sm:$0xff]
        %v477 = vld [vmem:[%s343 + $0x8] sm:$0xff]
        %v478 = vld [vmem:[%s343 + $0x10] sm:$0xff]
        %v479 = vld [vmem:[%s343 + $0x18] sm:$0xff]
        %s480 = sld [smem:[#allocation8 + $0x7]]
        %v481 = vstv %s480
        %v482 = vmul.f32 %v476, %v481
        %v483 = vmul.f32 %v477, %v481
        %v484 = vmul.f32 %v478, %v481
        %v485 = vmul.f32 %v479, %v481
        %v486 = vadd.f32 %v472, %v482
        %v487 = vadd.f32 %v473, %v483
        %v488 = vadd.f32 %v474, %v484
        %v489 = vadd.f32 %v475, %v485
        %v490 = vmul.f32 %v381, %v486
        %v491 = vmul.f32 %v383, %v487
        %v492 = vmul.f32 %v385, %v488
        %v493 = vmul.f32 %v387, %v489
        %s494 = sld [smem:[#allocation10 + $0x1]]
        %v495 = vstv %s494
        %v496 = vadd.f32 %v490, %v495
        %v497 = vadd.f32 %v491, %v495
        %v498 = vadd.f32 %v492, %v495
        %v499 = vadd.f32 %v493, %v495
        %s500 = scalar_lea.vmem %s300, 32 [#allocation11]
        %501 = vst [vmem:[%s500] sm:$0xff] %v496
        %502 = vst [vmem:[%s500 + $0x8] sm:$0xff] %v497
        %503 = vst [vmem:[%s500 + $0x10] sm:$0xff] %v498
        %504 = vst [vmem:[%s500 + $0x18] sm:$0xff] %v499
        %v505 = vld [vmem:[%s261] sm:$0xff]
        %v506 = vld [vmem:[%s261 + $0x8] sm:$0xff]
        %v507 = vld [vmem:[%s261 + $0x10] sm:$0xff]
        %v508 = vld [vmem:[%s261 + $0x18] sm:$0xff]
        %s509 = sld [smem:[#allocation8 + $0x8]]
        %v510 = vstv %s509
        %v511 = vmul.f32 %v505, %v510
        %v512 = vmul.f32 %v506, %v510
        %v513 = vmul.f32 %v507, %v510
        %v514 = vmul.f32 %v508, %v510
        %v515 = vld [vmem:[%s313] sm:$0xff]
        %v516 = vld [vmem:[%s313 + $0x8] sm:$0xff]
        %v517 = vld [vmem:[%s313 + $0x10] sm:$0xff]
        %v518 = vld [vmem:[%s313 + $0x18] sm:$0xff]
        %s519 = sld [smem:[#allocation8 + $0x9]]
        %v520 = vstv %s519
        %v521 = vmul.f32 %v515, %v520
        %v522 = vmul.f32 %v516, %v520
        %v523 = vmul.f32 %v517, %v520
        %v524 = vmul.f32 %v518, %v520
        %v525 = vadd.f32 %v511, %v521
        %v526 = vadd.f32 %v512, %v522
        %v527 = vadd.f32 %v513, %v523
        %v528 = vadd.f32 %v514, %v524
        %v529 = vld [vmem:[%s328] sm:$0xff]
        %v530 = vld [vmem:[%s328 + $0x8] sm:$0xff]
        %v531 = vld [vmem:[%s328 + $0x10] sm:$0xff]
        %v532 = vld [vmem:[%s328 + $0x18] sm:$0xff]
        %s533 = sld [smem:[#allocation8 + $0xa]]
        %v534 = vstv %s533
        %v535 = vmul.f32 %v529, %v534
        %v536 = vmul.f32 %v530, %v534
        %v537 = vmul.f32 %v531, %v534
        %v538 = vmul.f32 %v532, %v534
        %v539 = vadd.f32 %v525, %v535
        %v540 = vadd.f32 %v526, %v536
        %v541 = vadd.f32 %v527, %v537
        %v542 = vadd.f32 %v528, %v538
        %v543 = vld [vmem:[%s343] sm:$0xff]
        %v544 = vld [vmem:[%s343 + $0x8] sm:$0xff]
        %v545 = vld [vmem:[%s343 + $0x10] sm:$0xff]
        %v546 = vld [vmem:[%s343 + $0x18] sm:$0xff]
        %s547 = sld [smem:[#allocation8 + $0xb]]
        %v548 = vstv %s547
        %v549 = vmul.f32 %v543, %v548
        %v550 = vmul.f32 %v544, %v548
        %v551 = vmul.f32 %v545, %v548
        %v552 = vmul.f32 %v546, %v548
        %v553 = vadd.f32 %v539, %v549
        %v554 = vadd.f32 %v540, %v550
        %v555 = vadd.f32 %v541, %v551
        %v556 = vadd.f32 %v542, %v552
        %v557 = vmul.f32 %v381, %v553
        %v558 = vmul.f32 %v383, %v554
        %v559 = vmul.f32 %v385, %v555
        %v560 = vmul.f32 %v387, %v556
        %s561 = sld [smem:[#allocation10 + $0x2]]
        %v562 = vstv %s561
        %v563 = vadd.f32 %v557, %v562
        %v564 = vadd.f32 %v558, %v562
        %v565 = vadd.f32 %v559, %v562
        %v566 = vadd.f32 %v560, %v562
        %s567 = scalar_lea.vmem %s300, 64 [#allocation11]
        %568 = vst [vmem:[%s567] sm:$0xff] %v563
        %569 = vst [vmem:[%s567 + $0x8] sm:$0xff] %v564
        %570 = vst [vmem:[%s567 + $0x10] sm:$0xff] %v565
        %571 = vst [vmem:[%s567 + $0x18] sm:$0xff] %v566
        %v572 = vld [vmem:[%s261] sm:$0xff]
        %v573 = vld [vmem:[%s261 + $0x8] sm:$0xff]
        %v574 = vld [vmem:[%s261 + $0x10] sm:$0xff]
        %v575 = vld [vmem:[%s261 + $0x18] sm:$0xff]
        %s576 = sld [smem:[#allocation8 + $0xc]]
        %v577 = vstv %s576
        %v578 = vmul.f32 %v572, %v577
        %v579 = vmul.f32 %v573, %v577
        %v580 = vmul.f32 %v574, %v577
        %v581 = vmul.f32 %v575, %v577
        %v582 = vld [vmem:[%s313] sm:$0xff]
        %v583 = vld [vmem:[%s313 + $0x8] sm:$0xff]
        %v584 = vld [vmem:[%s313 + $0x10] sm:$0xff]
        %v585 = vld [vmem:[%s313 + $0x18] sm:$0xff]
        %s586 = sld [smem:[#allocation8 + $0xd]]
        %v587 = vstv %s586
        %v588 = vmul.f32 %v582, %v587
        %v589 = vmul.f32 %v583, %v587
        %v590 = vmul.f32 %v584, %v587
        %v591 = vmul.f32 %v585, %v587
        %v592 = vadd.f32 %v578, %v588
        %v593 = vadd.f32 %v579, %v589
        %v594 = vadd.f32 %v580, %v590
        %v595 = vadd.f32 %v581, %v591
        %v596 = vld [vmem:[%s328] sm:$0xff]
        %v597 = vld [vmem:[%s328 + $0x8] sm:$0xff]
        %v598 = vld [vmem:[%s328 + $0x10] sm:$0xff]
        %v599 = vld [vmem:[%s328 + $0x18] sm:$0xff]
        %s600 = sld [smem:[#allocation8 + $0xe]]
        %v601 = vstv %s600
        %v602 = vmul.f32 %v596, %v601
        %v603 = vmul.f32 %v597, %v601
        %v604 = vmul.f32 %v598, %v601
        %v605 = vmul.f32 %v599, %v601
        %v606 = vadd.f32 %v592, %v602
        %v607 = vadd.f32 %v593, %v603
        %v608 = vadd.f32 %v594, %v604
        %v609 = vadd.f32 %v595, %v605
        %v610 = vld [vmem:[%s343] sm:$0xff]
        %v611 = vld [vmem:[%s343 + $0x8] sm:$0xff]
        %v612 = vld [vmem:[%s343 + $0x10] sm:$0xff]
        %v613 = vld [vmem:[%s343 + $0x18] sm:$0xff]
        %s614 = sld [smem:[#allocation8 + $0xf]]
        %v615 = vstv %s614
        %v616 = vmul.f32 %v610, %v615
        %v617 = vmul.f32 %v611, %v615
        %v618 = vmul.f32 %v612, %v615
        %v619 = vmul.f32 %v613, %v615
        %v620 = vadd.f32 %v606, %v616
        %v621 = vadd.f32 %v607, %v617
        %v622 = vadd.f32 %v608, %v618
        %v623 = vadd.f32 %v609, %v619
        %v624 = vmul.f32 %v381, %v620
        %v625 = vmul.f32 %v383, %v621
        %v626 = vmul.f32 %v385, %v622
        %v627 = vmul.f32 %v387, %v623
        %s628 = sld [smem:[#allocation10 + $0x3]]
        %v629 = vstv %s628
        %v630 = vadd.f32 %v624, %v629
        %v631 = vadd.f32 %v625, %v629
        %v632 = vadd.f32 %v626, %v629
        %v633 = vadd.f32 %v627, %v629
        %s634 = scalar_lea.vmem %s300, 96 [#allocation11]
        %635 = vst [vmem:[%s634] sm:$0xff] %v630
        %636 = vst [vmem:[%s634 + $0x8] sm:$0xff] %v631
        %637 = vst [vmem:[%s634 + $0x10] sm:$0xff] %v632
        %638 = vst [vmem:[%s634 + $0x18] sm:$0xff] %v633
        %v639 = vld [vmem:[%s261] sm:$0xff]
        %v640 = vld [vmem:[%s261 + $0x8] sm:$0xff]
        %v641 = vld [vmem:[%s261 + $0x10] sm:$0xff]
        %v642 = vld [vmem:[%s261 + $0x18] sm:$0xff]
        %s643 = sld [smem:[#allocation8 + $0x10]]
        %v644 = vstv %s643
        %v645 = vmul.f32 %v639, %v644
        %v646 = vmul.f32 %v640, %v644
        %v647 = vmul.f32 %v641, %v644
        %v648 = vmul.f32 %v642, %v644
        %v649 = vld [vmem:[%s313] sm:$0xff]
        %v650 = vld [vmem:[%s313 + $0x8] sm:$0xff]
        %v651 = vld [vmem:[%s313 + $0x10] sm:$0xff]
        %v652 = vld [vmem:[%s313 + $0x18] sm:$0xff]
        %s653 = sld [smem:[#allocation8 + $0x11]]
        %v654 = vstv %s653
        %v655 = vmul.f32 %v649, %v654
        %v656 = vmul.f32 %v650, %v654
        %v657 = vmul.f32 %v651, %v654
        %v658 = vmul.f32 %v652, %v654
        %v659 = vadd.f32 %v645, %v655
        %v660 = vadd.f32 %v646, %v656
        %v661 = vadd.f32 %v647, %v657
        %v662 = vadd.f32 %v648, %v658
        %v663 = vld [vmem:[%s328] sm:$0xff]
        %v664 = vld [vmem:[%s328 + $0x8] sm:$0xff]
        %v665 = vld [vmem:[%s328 + $0x10] sm:$0xff]
        %v666 = vld [vmem:[%s328 + $0x18] sm:$0xff]
        %s667 = sld [smem:[#allocation8 + $0x12]]
        %v668 = vstv %s667
        %v669 = vmul.f32 %v663, %v668
        %v670 = vmul.f32 %v664, %v668
        %v671 = vmul.f32 %v665, %v668
        %v672 = vmul.f32 %v666, %v668
        %v673 = vadd.f32 %v659, %v669
        %v674 = vadd.f32 %v660, %v670
        %v675 = vadd.f32 %v661, %v671
        %v676 = vadd.f32 %v662, %v672
        %v677 = vld [vmem:[%s343] sm:$0xff]
        %v678 = vld [vmem:[%s343 + $0x8] sm:$0xff]
        %v679 = vld [vmem:[%s343 + $0x10] sm:$0xff]
        %v680 = vld [vmem:[%s343 + $0x18] sm:$0xff]
        %s681 = sld [smem:[#allocation8 + $0x13]]
        %v682 = vstv %s681
        %v683 = vmul.f32 %v677, %v682
        %v684 = vmul.f32 %v678, %v682
        %v685 = vmul.f32 %v679, %v682
        %v686 = vmul.f32 %v680, %v682
        %v687 = vadd.f32 %v673, %v683
        %v688 = vadd.f32 %v674, %v684
        %v689 = vadd.f32 %v675, %v685
        %v690 = vadd.f32 %v676, %v686
        %v691 = vmul.f32 %v381, %v687
        %v692 = vmul.f32 %v383, %v688
        %v693 = vmul.f32 %v385, %v689
        %v694 = vmul.f32 %v387, %v690
        %s695 = sld [smem:[#allocation10 + $0x4]]
        %v696 = vstv %s695
        %v697 = vadd.f32 %v691, %v696
        %v698 = vadd.f32 %v692, %v696
        %v699 = vadd.f32 %v693, %v696
        %v700 = vadd.f32 %v694, %v696
        %s701 = scalar_lea.vmem %s300, 128 [#allocation11]
        %702 = vst [vmem:[%s701] sm:$0xff] %v697
        %703 = vst [vmem:[%s701 + $0x8] sm:$0xff] %v698
        %704 = vst [vmem:[%s701 + $0x10] sm:$0xff] %v699
        %705 = vst [vmem:[%s701 + $0x18] sm:$0xff] %v700
        %v706 = vld [vmem:[%s261] sm:$0xff]
        %v707 = vld [vmem:[%s261 + $0x8] sm:$0xff]
        %v708 = vld [vmem:[%s261 + $0x10] sm:$0xff]
        %v709 = vld [vmem:[%s261 + $0x18] sm:$0xff]
        %s710 = sld [smem:[#allocation8 + $0x14]]
        %v711 = vstv %s710
        %v712 = vmul.f32 %v706, %v711
        %v713 = vmul.f32 %v707, %v711
        %v714 = vmul.f32 %v708, %v711
        %v715 = vmul.f32 %v709, %v711
        %v716 = vld [vmem:[%s313] sm:$0xff]
        %v717 = vld [vmem:[%s313 + $0x8] sm:$0xff]
        %v718 = vld [vmem:[%s313 + $0x10] sm:$0xff]
        %v719 = vld [vmem:[%s313 + $0x18] sm:$0xff]
        %s720 = sld [smem:[#allocation8 + $0x15]]
        %v721 = vstv %s720
        %v722 = vmul.f32 %v716, %v721
        %v723 = vmul.f32 %v717, %v721
        %v724 = vmul.f32 %v718, %v721
        %v725 = vmul.f32 %v719, %v721
        %v726 = vadd.f32 %v712, %v722
        %v727 = vadd.f32 %v713, %v723
        %v728 = vadd.f32 %v714, %v724
        %v729 = vadd.f32 %v715, %v725
        %v730 = vld [vmem:[%s328] sm:$0xff]
        %v731 = vld [vmem:[%s328 + $0x8] sm:$0xff]
        %v732 = vld [vmem:[%s328 + $0x10] sm:$0xff]
        %v733 = vld [vmem:[%s328 + $0x18] sm:$0xff]
        %s734 = sld [smem:[#allocation8 + $0x16]]
        %v735 = vstv %s734
        %v736 = vmul.f32 %v730, %v735
        %v737 = vmul.f32 %v731, %v735
        %v738 = vmul.f32 %v732, %v735
        %v739 = vmul.f32 %v733, %v735
        %v740 = vadd.f32 %v726, %v736
        %v741 = vadd.f32 %v727, %v737
        %v742 = vadd.f32 %v728, %v738
        %v743 = vadd.f32 %v729, %v739
        %v744 = vld [vmem:[%s343] sm:$0xff]
        %v745 = vld [vmem:[%s343 + $0x8] sm:$0xff]
        %v746 = vld [vmem:[%s343 + $0x10] sm:$0xff]
        %v747 = vld [vmem:[%s343 + $0x18] sm:$0xff]
        %s748 = sld [smem:[#allocation8 + $0x17]]
        %v749 = vstv %s748
        %v750 = vmul.f32 %v744, %v749
        %v751 = vmul.f32 %v745, %v749
        %v752 = vmul.f32 %v746, %v749
        %v753 = vmul.f32 %v747, %v749
        %v754 = vadd.f32 %v740, %v750
        %v755 = vadd.f32 %v741, %v751
        %v756 = vadd.f32 %v742, %v752
        %v757 = vadd.f32 %v743, %v753
        %v758 = vmul.f32 %v381, %v754
        %v759 = vmul.f32 %v383, %v755
        %v760 = vmul.f32 %v385, %v756
        %v761 = vmul.f32 %v387, %v757
        %s762 = sld [smem:[#allocation10 + $0x5]]
        %v763 = vstv %s762
        %v764 = vadd.f32 %v758, %v763
        %v765 = vadd.f32 %v759, %v763
        %v766 = vadd.f32 %v760, %v763
        %v767 = vadd.f32 %v761, %v763
        %s768 = scalar_lea.vmem %s300, 160 [#allocation11]
        %769 = vst [vmem:[%s768] sm:$0xff] %v764
        %770 = vst [vmem:[%s768 + $0x8] sm:$0xff] %v765
        %771 = vst [vmem:[%s768 + $0x10] sm:$0xff] %v766
        %772 = vst [vmem:[%s768 + $0x18] sm:$0xff] %v767
        %v773 = vld [vmem:[%s261] sm:$0xff]
        %v774 = vld [vmem:[%s261 + $0x8] sm:$0xff]
        %v775 = vld [vmem:[%s261 + $0x10] sm:$0xff]
        %v776 = vld [vmem:[%s261 + $0x18] sm:$0xff]
        %s777 = sld [smem:[#allocation8 + $0x18]]
        %v778 = vstv %s777
        %v779 = vmul.f32 %v773, %v778
        %v780 = vmul.f32 %v774, %v778
        %v781 = vmul.f32 %v775, %v778
        %v782 = vmul.f32 %v776, %v778
        %v783 = vld [vmem:[%s313] sm:$0xff]
        %v784 = vld [vmem:[%s313 + $0x8] sm:$0xff]
        %v785 = vld [vmem:[%s313 + $0x10] sm:$0xff]
        %v786 = vld [vmem:[%s313 + $0x18] sm:$0xff]
        %s787 = sld [smem:[#allocation8 + $0x19]]
        %v788 = vstv %s787
        %v789 = vmul.f32 %v783, %v788
        %v790 = vmul.f32 %v784, %v788
        %v791 = vmul.f32 %v785, %v788
        %v792 = vmul.f32 %v786, %v788
        %v793 = vadd.f32 %v779, %v789
        %v794 = vadd.f32 %v780, %v790
        %v795 = vadd.f32 %v781, %v791
        %v796 = vadd.f32 %v782, %v792
        %v797 = vld [vmem:[%s328] sm:$0xff]
        %v798 = vld [vmem:[%s328 + $0x8] sm:$0xff]
        %v799 = vld [vmem:[%s328 + $0x10] sm:$0xff]
        %v800 = vld [vmem:[%s328 + $0x18] sm:$0xff]
        %s801 = sld [smem:[#allocation8 + $0x1a]]
        %v802 = vstv %s801
        %v803 = vmul.f32 %v797, %v802
        %v804 = vmul.f32 %v798, %v802
        %v805 = vmul.f32 %v799, %v802
        %v806 = vmul.f32 %v800, %v802
        %v807 = vadd.f32 %v793, %v803
        %v808 = vadd.f32 %v794, %v804
        %v809 = vadd.f32 %v795, %v805
        %v810 = vadd.f32 %v796, %v806
        %v811 = vld [vmem:[%s343] sm:$0xff]
        %v812 = vld [vmem:[%s343 + $0x8] sm:$0xff]
        %v813 = vld [vmem:[%s343 + $0x10] sm:$0xff]
        %v814 = vld [vmem:[%s343 + $0x18] sm:$0xff]
        %s815 = sld [smem:[#allocation8 + $0x1b]]
        %v816 = vstv %s815
        %v817 = vmul.f32 %v811, %v816
        %v818 = vmul.f32 %v812, %v816
        %v819 = vmul.f32 %v813, %v816
        %v820 = vmul.f32 %v814, %v816
        %v821 = vadd.f32 %v807, %v817
        %v822 = vadd.f32 %v808, %v818
        %v823 = vadd.f32 %v809, %v819
        %v824 = vadd.f32 %v810, %v820
        %v825 = vmul.f32 %v381, %v821
        %v826 = vmul.f32 %v383, %v822
        %v827 = vmul.f32 %v385, %v823
        %v828 = vmul.f32 %v387, %v824
        %s829 = sld [smem:[#allocation10 + $0x6]]
        %v830 = vstv %s829
        %v831 = vadd.f32 %v825, %v830
        %v832 = vadd.f32 %v826, %v830
        %v833 = vadd.f32 %v827, %v830
        %v834 = vadd.f32 %v828, %v830
        %s835 = scalar_lea.vmem %s300, 192 [#allocation11]
        %836 = vst [vmem:[%s835] sm:$0xff] %v831
        %837 = vst [vmem:[%s835 + $0x8] sm:$0xff] %v832
        %838 = vst [vmem:[%s835 + $0x10] sm:$0xff] %v833
        %839 = vst [vmem:[%s835 + $0x18] sm:$0xff] %v834
        %v840 = vld [vmem:[%s261] sm:$0xff]
        %v841 = vld [vmem:[%s261 + $0x8] sm:$0xff]
        %v842 = vld [vmem:[%s261 + $0x10] sm:$0xff]
        %v843 = vld [vmem:[%s261 + $0x18] sm:$0xff]
        %s844 = sld [smem:[#allocation8 + $0x1c]]
        %v845 = vstv %s844
        %v846 = vmul.f32 %v840, %v845
        %v847 = vmul.f32 %v841, %v845
        %v848 = vmul.f32 %v842, %v845
        %v849 = vmul.f32 %v843, %v845
        %v850 = vld [vmem:[%s313] sm:$0xff]
        %v851 = vld [vmem:[%s313 + $0x8] sm:$0xff]
        %v852 = vld [vmem:[%s313 + $0x10] sm:$0xff]
        %v853 = vld [vmem:[%s313 + $0x18] sm:$0xff]
        %s854 = sld [smem:[#allocation8 + $0x1d]]
        %v855 = vstv %s854
        %v856 = vmul.f32 %v850, %v855
        %v857 = vmul.f32 %v851, %v855
        %v858 = vmul.f32 %v852, %v855
        %v859 = vmul.f32 %v853, %v855
        %v860 = vadd.f32 %v846, %v856
        %v861 = vadd.f32 %v847, %v857
        %v862 = vadd.f32 %v848, %v858
        %v863 = vadd.f32 %v849, %v859
        %v864 = vld [vmem:[%s328] sm:$0xff]
        %v865 = vld [vmem:[%s328 + $0x8] sm:$0xff]
        %v866 = vld [vmem:[%s328 + $0x10] sm:$0xff]
        %v867 = vld [vmem:[%s328 + $0x18] sm:$0xff]
        %s868 = sld [smem:[#allocation8 + $0x1e]]
        %v869 = vstv %s868
        %v870 = vmul.f32 %v864, %v869
        %v871 = vmul.f32 %v865, %v869
        %v872 = vmul.f32 %v866, %v869
        %v873 = vmul.f32 %v867, %v869
        %v874 = vadd.f32 %v860, %v870
        %v875 = vadd.f32 %v861, %v871
        %v876 = vadd.f32 %v862, %v872
        %v877 = vadd.f32 %v863, %v873
        %v878 = vld [vmem:[%s343] sm:$0xff]
        %v879 = vld [vmem:[%s343 + $0x8] sm:$0xff]
        %v880 = vld [vmem:[%s343 + $0x10] sm:$0xff]
        %v881 = vld [vmem:[%s343 + $0x18] sm:$0xff]
        %s882 = sld [smem:[#allocation8 + $0x1f]]
        %v883 = vstv %s882
        %v884 = vmul.f32 %v878, %v883
        %v885 = vmul.f32 %v879, %v883
        %v886 = vmul.f32 %v880, %v883
        %v887 = vmul.f32 %v881, %v883
        %v888 = vadd.f32 %v874, %v884
        %v889 = vadd.f32 %v875, %v885
        %v890 = vadd.f32 %v876, %v886
        %v891 = vadd.f32 %v877, %v887
        %v892 = vmul.f32 %v381, %v888
        %v893 = vmul.f32 %v383, %v889
        %v894 = vmul.f32 %v385, %v890
        %v895 = vmul.f32 %v387, %v891
        %s896 = sld [smem:[#allocation10 + $0x7]]
        %v897 = vstv %s896
        %v898 = vadd.f32 %v892, %v897
        %v899 = vadd.f32 %v893, %v897
        %v900 = vadd.f32 %v894, %v897
        %v901 = vadd.f32 %v895, %v897
        %s902 = scalar_lea.vmem %s300, 224 [#allocation11]
        %903 = vst [vmem:[%s902] sm:$0xff] %v898
        %904 = vst [vmem:[%s902 + $0x8] sm:$0xff] %v899
        %905 = vst [vmem:[%s902 + $0x10] sm:$0xff] %v900
        %906 = vst [vmem:[%s902 + $0x18] sm:$0xff] %v901
        %s907 = sand.u32 %s159, 1
        %s908 = scalar_lea.sflag [#allocation5], %s907
        %s909 = sand.u32 %s159, 1
        %s910 = smul.addr %s909, 256
        %s911 = scalar_lea.vmem [#allocation11], %s910
        // Predicated region
        $region57: #{tpu_custom_call.1} parent=39 // pred_check
          %p912 = pneg %p169
        $region58: #{tpu_custom_call.1} parent=39 // pred_check_branch
          %914 = sbr.rel (%p912) target = $region60
        $region59: #{tpu_custom_call.1} parent=39 // pred_region
          %s915 = smul.u32 4, %s30
          %s917 = ssub.s32 4096, 4096
          %918 = vsyncadd %s908, %s917
          %s919 = smul.addr %s29, 32
          %s920 = sadd.s32 %s915, %s919
          %s921 = smul.addr %s920, 128
          %s922 = scalar_lea.hbm %s5, %s921
          %s923 = sshll.u32 %s911, 4
          %s924 = int_to_ptr.vmem [resolvable:$true] %s923
          %929 = dma.vmem_to_hbm [thread:$0]  %s924, 4096, %s922, %s908, 128, 128, 8
        $region60: #{tpu_custom_call.1} parent=39 // pred_fallthru
          _
      $region40: #{tpu_custom_call.1} parent=5 // pred_fallthru
        _
      %p930 = scmp.le.s32.totalorder 2, %s20
      // Predicated region
      $region61: #{tpu_custom_call.1} parent=5 // pred_check
        %p931 = pneg %p930
      $region62: #{tpu_custom_call.1} parent=5 // pred_check_branch
        %933 = sbr.rel (%p931) target = $region64
      $region63: #{tpu_custom_call.1} parent=5 // pred_region
        %s934 = ssub.s32 %s20, 2
        // Predicated region
        $region65: #{tpu_custom_call.1} parent=63 // pred_check
          %p935 = pneg %p175
        $region66: #{tpu_custom_call.1} parent=63 // pred_check_branch
          %937 = sbr.rel (%p935) target = $region68
        $region67: #{tpu_custom_call.1} parent=63 // pred_region
          %s938 = sand.u32 %s160, 1
          %s939 = scalar_lea.sflag [#allocation5], %s938
          %s940 = sand.u32 %s160, 1
          %s941 = smul.addr %s940, 256
          %s942 = scalar_lea.vmem [#allocation11], %s941
          %943 = dma.done %s939, 4096
        $region68: #{tpu_custom_call.1} parent=63 // pred_fallthru
          _
      $region64: #{tpu_custom_call.1} parent=5 // pred_fallthru
        _
    $region6: #{tpu_custom_call.1} parent=1 // loop_footer
      %s24 = sadd.s32 1, %s20
    $region7: #{tpu_custom_call.1} parent=1 // loop_footer_branch
      %19 = sbr.rel target = $region3
    $region8: #{tpu_custom_call.1} parent=1 // loop_exit
      _
    %944 = vsyncpa [#allocation4], 1
    %s945 = scalar_lea.sflag [#allocation4], 1
    %946 = vsyncpa %s945, 1
    %947 = vsyncpa [#allocation5], 1
    %s948 = scalar_lea.sflag [#allocation5], 1
    %949 = vsyncpa %s948, 1
    %950 = vsyncpa [#allocation6], 1
    %s951 = scalar_lea.sflag [#allocation6], 1
    %952 = vsyncpa %s951, 1
    %953 = vsyncpa [#allocation9], 1

</llo_original>
